<compile_context>
chip_gen: v6e
topology: v6e:2x2x1
jax: 0.10.0
libtpu: 0.0.40
codegen_flags: <defaults>
</compile_context>

<pallas_src>
import math
from functools import partial

import jax
import jax.numpy as jnp
from jax.experimental import pallas as pl
from jax.experimental.pallas import tpu as pltpu


def _rup(v, m):
    return ((v + m - 1) // m) * m


def _pick_c_tile(c2, la, out_itemsize, budget_bytes=8 << 20, granule=16):
    # Channel tile over 2*Cout: a multiple of 16 (covers f32/bf16 sublane
    # granules) that divides 2*Cout and keeps the double-buffered output block
    # under ~budget_bytes.  Falls back to the full extent (always legal).
    if c2 % granule != 0:
        return c2
    ct = c2
    while ct > granule and 2 * ct * la * out_itemsize > budget_bytes:
        nxt = ct // 2
        nxt -= nxt % granule
        if nxt < granule or c2 % nxt != 0:
            break
        ct = nxt
    return ct


@partial(jax.jit,
         static_argnames=("stride", "padding", "dilation", "compute_dtype"))
def complex_conv2d(x, w_re, w_im, b_re=None, b_im=None, *, stride=1,
                   padding=0, dilation=1, compute_dtype=jnp.bfloat16):
    """Forward of ComplexConv2d.  x: [B, Cin, H, W, 2] (last dim = real/imag)."""
    B, Cin, H, W, _ = x.shape
    Cout, _, kh, kw = w_re.shape
    out_dtype = x.dtype

    Ho = (H + 2 * padding - dilation * (kh - 1) - 1) // stride + 1
    Wo = (W + 2 * padding - dilation * (kw - 1) - 1) // stride + 1
    Hp = H + 2 * padding
    Wp = W + 2 * padding
    out_rows = (Ho - 1) * stride + 1
    La = out_rows * Wp                       # lane extent of one output slab
    # Extra zero rows at the bottom so every tap's [off, off+La) slice stays
    # in bounds (max off = (kh-1)*dil*Wp + (kw-1)*dil).
    Hp_ext = max(Hp, out_rows + (kh - 1) * dilation + 1)
    Lp = Hp_ext * Wp

    Cin2, C2, T = 2 * Cin, 2 * Cout, kh * kw

    # ------------- glue: plane-major channels, pad, cast, flatten ------------
    # [B, Cin, H, W, 2] -> [B, 2*Cin, H, W]  (all real planes, then all imag).
    xp = jnp.moveaxis(x, -1, 1).reshape(B, Cin2, H, W).astype(compute_dtype)
    xp = jnp.pad(xp, ((0, 0), (0, 0),
                      (padding, padding + (Hp_ext - Hp)),
                      (padding, padding)))
    x_flat = xp.reshape(B, Cin2, Lp)         # free reshape (contiguous dims)

    # Fused complex weights: real-out rows [Wr | -Wi], imag-out rows [Wi | Wr].
    w_big = jnp.concatenate(
        [jnp.concatenate([w_re, -w_im], axis=1),
         jnp.concatenate([w_im, w_re], axis=1)], axis=0)   # [C2, Cin2, kh, kw]
    w_taps = jnp.transpose(w_big, (2, 3, 0, 1)).reshape(T, C2, Cin2)
    w_taps = w_taps.astype(compute_dtype)

    if b_re is None:
        b_re = jnp.zeros((Cout,), jnp.float32)
    if b_im is None:
        b_im = jnp.zeros((Cout,), jnp.float32)
    bias = jnp.concatenate([b_re - b_im, b_re + b_im]).astype(jnp.float32)
    bias = bias[:, None]                                    # [C2, 1]

    in_isize = jnp.dtype(compute_dtype).itemsize
    out_isize = jnp.dtype(out_dtype).itemsize
    c_tile = _pick_c_tile(C2, La, out_isize)
    n_c = C2 // c_tile

    # VMEM budget (double-buffered blocks + f32 accumulator), with headroom.
    vmem_est = (2 * _rup(Cin2, 16) * _rup(Lp, 128) * in_isize
                + 2 * _rup(c_tile, 16) * _rup(La, 128) * out_isize
                + 2 * T * _rup(c_tile, 16) * _rup(Cin2, 128) * in_isize
                + 2 * _rup(c_tile, 16) * 128 * 4
                + _rup(c_tile, 16) * _rup(La, 128) * 4)
    vmem_limit = int(min(max(2 * vmem_est, 32 * 1024 * 1024),
                         96 * 1024 * 1024))

    cost = pl.CostEstimate(
        flops=2 * B * T * C2 * Cin2 * La,
        transcendentals=0,
        bytes_accessed=(B * Cin2 * Lp * in_isize
                        + T * C2 * Cin2 * in_isize + C2 * 4
                        + B * C2 * La * out_isize))

    # --------------------------- Pallas kernel -------------------------------
    def kernel(w_ref, b_ref, x_ref, o_ref):
        # w_ref: [T, c_tile, 2*Cin]  fused complex weights per tap
        # b_ref: [c_tile, 1]         fused bias (f32)
        # x_ref: [2*Cin, Lp]         one batch's padded planes, flat (lanes=Lp)
        # o_ref: [c_tile, La]        lane-dense output slab
        acc = jnp.zeros((c_tile, La), jnp.float32)
        for i in range(kh):
            for j in range(kw):
                off = dilation * (i * Wp + j)
                acc = acc + jnp.dot(w_ref[i * kw + j],
                                    x_ref[:, off:off + La],
                                    preferred_element_type=jnp.float32)
        o_ref[...] = (acc + b_ref[...]).astype(o_ref.dtype)

    out_big = pl.pallas_call(
        kernel,
        out_shape=jax.ShapeDtypeStruct((B, C2, La), out_dtype),
        grid_spec=pltpu.PrefetchScalarGridSpec(
            num_scalar_prefetch=0,
            grid=(B, n_c),
            in_specs=[
                pl.BlockSpec((T, c_tile, Cin2), lambda b, c: (0, c, 0)),
                pl.BlockSpec((c_tile, 1), lambda b, c: (c, 0)),
                # x block index only depends on b -> no re-DMA across c steps.
                pl.BlockSpec((None, Cin2, Lp), lambda b, c: (b, 0, 0)),
            ],
            out_specs=pl.BlockSpec((None, c_tile, La), lambda b, c: (b, c, 0)),
        ),
        compiler_params=pltpu.CompilerParams(
            dimension_semantics=("parallel", "parallel"),
            vmem_limit_bytes=vmem_limit,
            allow_input_fusion=[False, False, True],
        ),
        cost_estimate=cost,
    )(w_taps, bias, x_flat)

    # ---- epilogue: strided-slice the padded plane, move real/imag to last ---
    # TODO(synk): downstream DCUNet layers could consume the plane-major
    #             [B, 2*Cout, La] layout directly and skip this transpose.
    y = out_big.reshape(B, 2, Cout, out_rows, Wp)
    y = y[..., ::stride, ::stride][..., :Ho, :Wo]           # [B, 2, Cout, Ho, Wo]
    return jnp.moveaxis(y, 1, -1)                           # [B, Cout, Ho, Wo, 2]


# ---------------------------------------------------------------------------
# Pure-JAX reference (mirrors the PyTorch forward exactly) for sanity checks.
# ---------------------------------------------------------------------------
def _ref_conv(x, w, b, stride, padding, dilation):
    out = jax.lax.conv_general_dilated(
        x, w, window_strides=(stride, stride),
        padding=((padding, padding), (padding, padding)),
        rhs_dilation=(dilation, dilation),
        dimension_numbers=("NCHW", "OIHW", "NCHW"))
    return out + b[None, :, None, None]


def _ref_complex_conv2d(x, w_re, w_im, b_re, b_im, *, stride, padding, dilation):
    xr, xi = x[..., 0], x[..., 1]
    real = (_ref_conv(xr, w_re, b_re, stride, padding, dilation)
            - _ref_conv(xi, w_im, b_im, stride, padding, dilation))
    imag = (_ref_conv(xi, w_re, b_re, stride, padding, dilation)
            + _ref_conv(xr, w_im, b_im, stride, padding, dilation))
    return jnp.stack((real, imag), axis=-1)


if __name__ == "__main__":
    # Small, module-consistent shapes: B=2, Cin=4, Cout=8, H=W=16, k=3, pad=1.
    B, Cin, Cout, H, W = 2, 4, 8, 16, 16
    kh = kw = 3
    stride, padding, dilation = 1, 1, 1

    key = jax.random.PRNGKey(0)
    kx, kwr, kwi, kbr, kbi = jax.random.split(key, 5)

    x = jax.random.normal(kx, (B, Cin, H, W, 2), dtype=jnp.float32)

    # Conv2d-style init: U(-bound, bound), bound = 1/sqrt(fan_in).
    fan_in = Cin * kh * kw
    bound = 1.0 / math.sqrt(fan_in)
    w_re = jax.random.uniform(kwr, (Cout, Cin, kh, kw), jnp.float32, -bound, bound)
    w_im = jax.random.uniform(kwi, (Cout, Cin, kh, kw), jnp.float32, -bound, bound)
    b_re = jax.random.uniform(kbr, (Cout,), jnp.float32, -bound, bound)
    b_im = jax.random.uniform(kbi, (Cout,), jnp.float32, -bound, bound)

    ref = jax.block_until_ready(
        _ref_complex_conv2d(x, w_re, w_im, b_re, b_im,
                            stride=stride, padding=padding, dilation=dilation))

    # f32 path: tight check of the kernel algebra / indexing.
    out_f32 = jax.block_until_ready(
        complex_conv2d(x, w_re, w_im, b_re, b_im, stride=stride,
                       padding=padding, dilation=dilation,
                       compute_dtype=jnp.float32))
    assert out_f32.shape == (B, Cout, H, W, 2), out_f32.shape
    assert jnp.allclose(out_f32, ref, atol=1e-4, rtol=1e-4), \
        f"f32 max abs err {jnp.max(jnp.abs(out_f32 - ref))}"

    # Default path (bf16 inputs, f32 MXU accumulation): looser tolerance.
    out_bf16 = jax.block_until_ready(
        complex_conv2d(x, w_re, w_im, b_re, b_im, stride=stride,
                       padding=padding, dilation=dilation))
    assert out_bf16.shape == (B, Cout, H, W, 2), out_bf16.shape
    bf16_err = float(jnp.max(jnp.abs(out_bf16 - ref)))
    assert bf16_err < 5e-2, f"bf16 max abs err {bf16_err}"

    print("KERNEL_OK")
</pallas_src>

<mosaic_0001>
module attributes {stable_mosaic.version = 11 : i64} {
  func.func @kernel(%arg0: i32, %arg1: i32, %arg2: memref<9x16x8xf32, #tpu.memory_space<vmem>>, %arg3: memref<16x1xf32, #tpu.memory_space<vmem>>, %arg4: memref<1x8x342xf32, #tpu.memory_space<vmem>>, %arg5: memref<1x16x288xf32, #tpu.memory_space<vmem>>) attributes {dimension_semantics = [#tpu.dimension_semantics<parallel>, #tpu.dimension_semantics<parallel>], iteration_bounds = array<i64: 2, 1>, scalar_prefetch = 0 : i64, scratch_operands = 0 : i64, tpu.core_type = #tpu.core_type<tc>, window_params = [{transform_indices = @transform_0, window_bounds = array<i64: 9, 16, 8>}, {transform_indices = @transform_1, window_bounds = array<i64: 16, 1>}, {transform_indices = @transform_2, window_bounds = array<i64: 1, 8, 342>}, {transform_indices = @transform_3, window_bounds = array<i64: 1, 16, 288>}]} {
    %cst = arith.constant 0.000000e+00 : f32
    %0 = vector.broadcast %cst : f32 to vector<16x288xf32>
    %c0 = arith.constant 0 : index
    %c0_0 = arith.constant 0 : index
    %c0_1 = arith.constant 0 : index
    %1 = vector.load %arg2[%c0, %c0_0, %c0_1] : memref<9x16x8xf32, #tpu.memory_space<vmem>>, vector<1x16x8xf32>
    %2 = vector.shape_cast %1 : vector<1x16x8xf32> to vector<16x8xf32>
    %c0_2 = arith.constant 0 : index
    %c0_3 = arith.constant 0 : index
    %c0_4 = arith.constant 0 : index
    %3 = vector.load %arg4[%c0_2, %c0_3, %c0_4] : memref<1x8x342xf32, #tpu.memory_space<vmem>>, vector<1x8x288xf32>
    %4 = vector.shape_cast %3 : vector<1x8x288xf32> to vector<8x288xf32>
    %cst_5 = arith.constant dense<0.000000e+00> : vector<16x288xf32>
    %5 = tpu.matmul %2, %4, %cst_5 {dimension_numbers = #tpu.dot_dimension_numbers<[1], [0], [0], [1], [0, 0, 1, 1], [], []>} : vector<16x8xf32>, vector<8x288xf32>, vector<16x288xf32> -> vector<16x288xf32>
    %6 = arith.addf %0, %5 : vector<16x288xf32>
    %c1 = arith.constant 1 : index
    %c0_6 = arith.constant 0 : index
    %c0_7 = arith.constant 0 : index
    %7 = vector.load %arg2[%c1, %c0_6, %c0_7] : memref<9x16x8xf32, #tpu.memory_space<vmem>>, vector<1x16x8xf32>
    %8 = vector.shape_cast %7 : vector<1x16x8xf32> to vector<16x8xf32>
    %c0_8 = arith.constant 0 : index
    %c0_9 = arith.constant 0 : index
    %c1_10 = arith.constant 1 : index
    %9 = vector.load %arg4[%c0_8, %c0_9, %c1_10] : memref<1x8x342xf32, #tpu.memory_space<vmem>>, vector<1x8x288xf32>
    %10 = vector.shape_cast %9 : vector<1x8x288xf32> to vector<8x288xf32>
    %cst_11 = arith.constant dense<0.000000e+00> : vector<16x288xf32>
    %11 = tpu.matmul %8, %10, %cst_11 {dimension_numbers = #tpu.dot_dimension_numbers<[1], [0], [0], [1], [0, 0, 1, 1], [], []>} : vector<16x8xf32>, vector<8x288xf32>, vector<16x288xf32> -> vector<16x288xf32>
    %12 = arith.addf %6, %11 : vector<16x288xf32>
    %c2 = arith.constant 2 : index
    %c0_12 = arith.constant 0 : index
    %c0_13 = arith.constant 0 : index
    %13 = vector.load %arg2[%c2, %c0_12, %c0_13] : memref<9x16x8xf32, #tpu.memory_space<vmem>>, vector<1x16x8xf32>
    %14 = vector.shape_cast %13 : vector<1x16x8xf32> to vector<16x8xf32>
    %c0_14 = arith.constant 0 : index
    %c0_15 = arith.constant 0 : index
    %c2_16 = arith.constant 2 : index
    %15 = vector.load %arg4[%c0_14, %c0_15, %c2_16] : memref<1x8x342xf32, #tpu.memory_space<vmem>>, vector<1x8x288xf32>
    %16 = vector.shape_cast %15 : vector<1x8x288xf32> to vector<8x288xf32>
    %cst_17 = arith.constant dense<0.000000e+00> : vector<16x288xf32>
    %17 = tpu.matmul %14, %16, %cst_17 {dimension_numbers = #tpu.dot_dimension_numbers<[1], [0], [0], [1], [0, 0, 1, 1], [], []>} : vector<16x8xf32>, vector<8x288xf32>, vector<16x288xf32> -> vector<16x288xf32>
    %18 = arith.addf %12, %17 : vector<16x288xf32>
    %c3 = arith.constant 3 : index
    %c0_18 = arith.constant 0 : index
    %c0_19 = arith.constant 0 : index
    %19 = vector.load %arg2[%c3, %c0_18, %c0_19] : memref<9x16x8xf32, #tpu.memory_space<vmem>>, vector<1x16x8xf32>
    %20 = vector.shape_cast %19 : vector<1x16x8xf32> to vector<16x8xf32>
    %c0_20 = arith.constant 0 : index
    %c0_21 = arith.constant 0 : index
    %c18 = arith.constant 18 : index
    %21 = vector.load %arg4[%c0_20, %c0_21, %c18] : memref<1x8x342xf32, #tpu.memory_space<vmem>>, vector<1x8x288xf32>
    %22 = vector.shape_cast %21 : vector<1x8x288xf32> to vector<8x288xf32>
    %cst_22 = arith.constant dense<0.000000e+00> : vector<16x288xf32>
    %23 = tpu.matmul %20, %22, %cst_22 {dimension_numbers = #tpu.dot_dimension_numbers<[1], [0], [0], [1], [0, 0, 1, 1], [], []>} : vector<16x8xf32>, vector<8x288xf32>, vector<16x288xf32> -> vector<16x288xf32>
    %24 = arith.addf %18, %23 : vector<16x288xf32>
    %c4 = arith.constant 4 : index
    %c0_23 = arith.constant 0 : index
    %c0_24 = arith.constant 0 : index
    %25 = vector.load %arg2[%c4, %c0_23, %c0_24] : memref<9x16x8xf32, #tpu.memory_space<vmem>>, vector<1x16x8xf32>
    %26 = vector.shape_cast %25 : vector<1x16x8xf32> to vector<16x8xf32>
    %c0_25 = arith.constant 0 : index
    %c0_26 = arith.constant 0 : index
    %c19 = arith.constant 19 : index
    %27 = vector.load %arg4[%c0_25, %c0_26, %c19] : memref<1x8x342xf32, #tpu.memory_space<vmem>>, vector<1x8x288xf32>
    %28 = vector.shape_cast %27 : vector<1x8x288xf32> to vector<8x288xf32>
    %cst_27 = arith.constant dense<0.000000e+00> : vector<16x288xf32>
    %29 = tpu.matmul %26, %28, %cst_27 {dimension_numbers = #tpu.dot_dimension_numbers<[1], [0], [0], [1], [0, 0, 1, 1], [], []>} : vector<16x8xf32>, vector<8x288xf32>, vector<16x288xf32> -> vector<16x288xf32>
    %30 = arith.addf %24, %29 : vector<16x288xf32>
    %c5 = arith.constant 5 : index
    %c0_28 = arith.constant 0 : index
    %c0_29 = arith.constant 0 : index
    %31 = vector.load %arg2[%c5, %c0_28, %c0_29] : memref<9x16x8xf32, #tpu.memory_space<vmem>>, vector<1x16x8xf32>
    %32 = vector.shape_cast %31 : vector<1x16x8xf32> to vector<16x8xf32>
    %c0_30 = arith.constant 0 : index
    %c0_31 = arith.constant 0 : index
    %c20 = arith.constant 20 : index
    %33 = vector.load %arg4[%c0_30, %c0_31, %c20] : memref<1x8x342xf32, #tpu.memory_space<vmem>>, vector<1x8x288xf32>
    %34 = vector.shape_cast %33 : vector<1x8x288xf32> to vector<8x288xf32>
    %cst_32 = arith.constant dense<0.000000e+00> : vector<16x288xf32>
    %35 = tpu.matmul %32, %34, %cst_32 {dimension_numbers = #tpu.dot_dimension_numbers<[1], [0], [0], [1], [0, 0, 1, 1], [], []>} : vector<16x8xf32>, vector<8x288xf32>, vector<16x288xf32> -> vector<16x288xf32>
    %36 = arith.addf %30, %35 : vector<16x288xf32>
    %c6 = arith.constant 6 : index
    %c0_33 = arith.constant 0 : index
    %c0_34 = arith.constant 0 : index
    %37 = vector.load %arg2[%c6, %c0_33, %c0_34] : memref<9x16x8xf32, #tpu.memory_space<vmem>>, vector<1x16x8xf32>
    %38 = vector.shape_cast %37 : vector<1x16x8xf32> to vector<16x8xf32>
    %c0_35 = arith.constant 0 : index
    %c0_36 = arith.constant 0 : index
    %c36 = arith.constant 36 : index
    %39 = vector.load %arg4[%c0_35, %c0_36, %c36] : memref<1x8x342xf32, #tpu.memory_space<vmem>>, vector<1x8x288xf32>
    %40 = vector.shape_cast %39 : vector<1x8x288xf32> to vector<8x288xf32>
    %cst_37 = arith.constant dense<0.000000e+00> : vector<16x288xf32>
    %41 = tpu.matmul %38, %40, %cst_37 {dimension_numbers = #tpu.dot_dimension_numbers<[1], [0], [0], [1], [0, 0, 1, 1], [], []>} : vector<16x8xf32>, vector<8x288xf32>, vector<16x288xf32> -> vector<16x288xf32>
    %42 = arith.addf %36, %41 : vector<16x288xf32>
    %c7 = arith.constant 7 : index
    %c0_38 = arith.constant 0 : index
    %c0_39 = arith.constant 0 : index
    %43 = vector.load %arg2[%c7, %c0_38, %c0_39] : memref<9x16x8xf32, #tpu.memory_space<vmem>>, vector<1x16x8xf32>
    %44 = vector.shape_cast %43 : vector<1x16x8xf32> to vector<16x8xf32>
    %c0_40 = arith.constant 0 : index
    %c0_41 = arith.constant 0 : index
    %c37 = arith.constant 37 : index
    %45 = vector.load %arg4[%c0_40, %c0_41, %c37] : memref<1x8x342xf32, #tpu.memory_space<vmem>>, vector<1x8x288xf32>
    %46 = vector.shape_cast %45 : vector<1x8x288xf32> to vector<8x288xf32>
    %cst_42 = arith.constant dense<0.000000e+00> : vector<16x288xf32>
    %47 = tpu.matmul %44, %46, %cst_42 {dimension_numbers = #tpu.dot_dimension_numbers<[1], [0], [0], [1], [0, 0, 1, 1], [], []>} : vector<16x8xf32>, vector<8x288xf32>, vector<16x288xf32> -> vector<16x288xf32>
    %48 = arith.addf %42, %47 : vector<16x288xf32>
    %c8 = arith.constant 8 : index
    %c0_43 = arith.constant 0 : index
    %c0_44 = arith.constant 0 : index
    %49 = vector.load %arg2[%c8, %c0_43, %c0_44] : memref<9x16x8xf32, #tpu.memory_space<vmem>>, vector<1x16x8xf32>
    %50 = vector.shape_cast %49 : vector<1x16x8xf32> to vector<16x8xf32>
    %c0_45 = arith.constant 0 : index
    %c0_46 = arith.constant 0 : index
    %c38 = arith.constant 38 : index
    %51 = vector.load %arg4[%c0_45, %c0_46, %c38] : memref<1x8x342xf32, #tpu.memory_space<vmem>>, vector<1x8x288xf32>
    %52 = vector.shape_cast %51 : vector<1x8x288xf32> to vector<8x288xf32>
    %cst_47 = arith.constant dense<0.000000e+00> : vector<16x288xf32>
    %53 = tpu.matmul %50, %52, %cst_47 {dimension_numbers = #tpu.dot_dimension_numbers<[1], [0], [0], [1], [0, 0, 1, 1], [], []>} : vector<16x8xf32>, vector<8x288xf32>, vector<16x288xf32> -> vector<16x288xf32>
    %54 = arith.addf %48, %53 : vector<16x288xf32>
    %c0_48 = arith.constant 0 : index
    %c0_49 = arith.constant 0 : index
    %55 = vector.load %arg3[%c0_48, %c0_49] : memref<16x1xf32, #tpu.memory_space<vmem>>, vector<16x1xf32>
    %56 = vector.broadcast %55 : vector<16x1xf32> to vector<16x288xf32>
    %57 = arith.addf %54, %56 : vector<16x288xf32>
    %c0_50 = arith.constant 0 : index
    %c0_51 = arith.constant 0 : index
    %c0_52 = arith.constant 0 : index
    %58 = vector.load %arg5[%c0_50, %c0_51, %c0_52] : memref<1x16x288xf32, #tpu.memory_space<vmem>>, vector<1x16x288xf32>
    %59 = vector.shape_cast %58 : vector<1x16x288xf32> to vector<16x288xf32>
    %60 = vector.shape_cast %57 : vector<16x288xf32> to vector<1x16x288xf32>
    tpu.vector_store %arg5[%c0_50, %c0_51, %c0_52], %60 {strides = array<i32>} : memref<1x16x288xf32, #tpu.memory_space<vmem>>, vector<1x16x288xf32>,
    return
  }
  func.func @transform_0(%arg0: i32, %arg1: i32) -> (i32, i32, i32) {
    %c0_i32 = arith.constant 0 : i32
    %c0_i32_0 = arith.constant 0 : i32
    %c0_i32_1 = arith.constant 0 : i32
    return %c0_i32, %arg1, %c0_i32_0 : i32, i32, i32
  }
  func.func @transform_1(%arg0: i32, %arg1: i32) -> (i32, i32) {
    %c0_i32 = arith.constant 0 : i32
    %c0_i32_0 = arith.constant 0 : i32
    return %arg1, %c0_i32 : i32, i32
  }
  func.func @transform_2(%arg0: i32, %arg1: i32) -> (i32, i32, i32) {
    %c0_i32 = arith.constant 0 : i32
    %c0_i32_0 = arith.constant 0 : i32
    %c0_i32_1 = arith.constant 0 : i32
    return %arg0, %c0_i32, %c0_i32_0 : i32, i32, i32
  }
  func.func @transform_3(%arg0: i32, %arg1: i32) -> (i32, i32, i32) {
    %c0_i32 = arith.constant 0 : i32
    %c0_i32_0 = arith.constant 0 : i32
    return %arg0, %arg1, %c0_i32 : i32, i32, i32
  }
}

</mosaic_0001>

<llo_original>
// kernel: neg.1
$region0: #{neg.1}
  #allocation2 [shape = 's32[1]{0}', space=sflag, size = 0x4, scoped, tag = 'scoped memory for neg.1']
  %s0 = inlined_call_operand.hbm [shape: f32[8,4,3,3], index: 0, kind: input, shape index: {}]
  %s1 = inlined_call_operand.vmem [shape: f32[8,4,3,3], index: 1, kind: output, shape index: {}]
  $region1: #{neg.1} parent=0
    #allocation0 [shape = 'u8[18432]{0}', space=vmem, size = 0x4800, scoped, tag = 'operand span for operand 0']
    #allocation1 [shape = 's32[1]{0}', space=sflag, size = 0x4, scoped, tag = 'scoped memory for neg.1']
    %2 = vsyncpa [#allocation1], 0
    %s4 = ssub.s32 576, 576
    %5 = vsyncadd [#allocation1], %s4
    %s6 = sshll.u32 [#allocation0], 4
    %s7 = int_to_ptr.vmem [resolvable:$true] %s6
    %12 = dma.hbm_to_vmem [thread:$0]  %s0, 576, %s7, [#allocation1], 64, 64, 4
    %13 = dma.done [#allocation1], 576
    %v14 = vld [vmem:[#allocation0] sm:$0xf]
    %15 = xla_tuple %v14
    %16 = xla_tuple %15
    %v17 = vxor.u32 %v14, 2147483648
    %18 = xla_tuple %v17
    %19 = vst [vmem:[%s1] sm:$0xf] %v17
    %s20 = scalar_lea.vmem [#allocation0], 12
    %v21 = vld [vmem:[%s20] sm:$0xf]
    %22 = xla_tuple %v21
    %23 = xla_tuple %22
    %v24 = vxor.u32 %v21, 2147483648
    %25 = xla_tuple %v24
    %s26 = scalar_lea.vmem %s1, 12
    %27 = vst [vmem:[%s26] sm:$0xf] %v24
    %s28 = scalar_lea.vmem [#allocation0], 24
    %v29 = vld [vmem:[%s28] sm:$0xf]
    %30 = xla_tuple %v29
    %31 = xla_tuple %30
    %v32 = vxor.u32 %v29, 2147483648
    %33 = xla_tuple %v32
    %s34 = scalar_lea.vmem %s1, 24
    %35 = vst [vmem:[%s34] sm:$0xf] %v32
    %s36 = scalar_lea.vmem [#allocation0], 4
    %v37 = vld [vmem:[%s36] sm:$0xf]
    %38 = xla_tuple %v37
    %39 = xla_tuple %38
    %v40 = vxor.u32 %v37, 2147483648
    %41 = xla_tuple %v40
    %s42 = scalar_lea.vmem %s1, 4
    %43 = vst [vmem:[%s42] sm:$0xf] %v40
    %s44 = scalar_lea.vmem [#allocation0], 16
    %v45 = vld [vmem:[%s44] sm:$0xf]
    %46 = xla_tuple %v45
    %47 = xla_tuple %46
    %v48 = vxor.u32 %v45, 2147483648
    %49 = xla_tuple %v48
    %s50 = scalar_lea.vmem %s1, 16
    %51 = vst [vmem:[%s50] sm:$0xf] %v48
    %s52 = scalar_lea.vmem [#allocation0], 28
    %v53 = vld [vmem:[%s52] sm:$0xf]
    %54 = xla_tuple %v53
    %55 = xla_tuple %54
    %v56 = vxor.u32 %v53, 2147483648
    %57 = xla_tuple %v56
    %s58 = scalar_lea.vmem %s1, 28
    %59 = vst [vmem:[%s58] sm:$0xf] %v56
    %s60 = scalar_lea.vmem [#allocation0], 8
    %v61 = vld [vmem:[%s60] sm:$0xf]
    %62 = xla_tuple %v61
    %63 = xla_tuple %62
    %v64 = vxor.u32 %v61, 2147483648
    %65 = xla_tuple %v64
    %s66 = scalar_lea.vmem %s1, 8
    %67 = vst [vmem:[%s66] sm:$0xf] %v64
    %s68 = scalar_lea.vmem [#allocation0], 20
    %v69 = vld [vmem:[%s68] sm:$0xf]
    %70 = xla_tuple %v69
    %71 = xla_tuple %70
    %v72 = vxor.u32 %v69, 2147483648
    %73 = xla_tuple %v72
    %s74 = scalar_lea.vmem %s1, 20
    %75 = vst [vmem:[%s74] sm:$0xf] %v72
    %s76 = scalar_lea.vmem [#allocation0], 32
    %v77 = vld [vmem:[%s76] sm:$0xf]
    %78 = xla_tuple %v77
    %79 = xla_tuple %78
    %v80 = vxor.u32 %v77, 2147483648
    %81 = xla_tuple %v80
    %s82 = scalar_lea.vmem %s1, 32
    %83 = vst [vmem:[%s82] sm:$0xf] %v80
    %84 = vsyncpa [#allocation1], 1

// kernel: complex_conv2d.1
$region0: #{complex_conv2d.1}
  #allocation0 [shape = 'u32[]', space=smem, size = 0x4, offset = 0x4, fixed_abs, tag = 'smem constant byte address 0x4 - core index']
  #allocation1 [shape = 'u32[144,128]{1,0:T(1,128)}', space=vmem, size = 0x12000, scoped, tag = 'internal scratch']
  %s0 = inlined_call_operand.vmem [shape: f32[9,16,8], index: 0, kind: input, shape index: {}]
  %s1 = inlined_call_operand.vmem [shape: f32[16,1], index: 1, kind: input, shape index: {}]
  %s2 = inlined_call_operand.vmem [shape: f32[2,8,342], index: 2, kind: input, shape index: {}]
  %s3 = inlined_call_operand.vmem [shape: f32[2,16,288], index: 3, kind: output, shape index: {}]
  %s4 = sld [smem:[#allocation0]]
  $region45: #{complex_conv2d.1} parent=0
    _
  %s6 = ssub.s32 1, %s4
  %s7 = scalar_select 0, %s6, %s4
  loop: start=0, step=1, limit=4
  $region2: #{complex_conv2d.1} parent=0 // loop_pre_header
    _
  $region3: #{complex_conv2d.1} parent=0 // loop_header
    %s9 = sphi 0, %s13
    %p10 = scmp.ge.s32.totalorder %s9, 4
    %s16 = sphi 0, %s28
    %s17 = sphi 0, %s24
    %s18 = sphi 0, %s16
    %s19 = sphi 0, %s17
    %s20 = sphi 0, %s18
    %s21 = sphi 0, %s19
    %s31 = sphi 0, %s33
    %s34 = sphi 0, %s31
    %s35 = sphi 0, %s34
    %s51 = sphi 0, %s35
    %s57 = sphi 0, %s59
    %s60 = sphi 0, %s57
    %s61 = sphi 0, %s60
    %s77 = sphi 0, %s61
    %s83 = sphi 0, %s85
    %s86 = sphi 0, %s83
    %s87 = sphi 0, %s86
    %s103 = sphi 0, %s87
    %s111 = sphi 0, %s113
    %s114 = sphi 0, %s111
    %s115 = sphi 0, %s114
    %s131 = sphi 0, %s115
  $region4: #{complex_conv2d.1} parent=0 // loop_header_branch
    %12 = sbr.rel (%p10) target = $region8
  $region5: #{complex_conv2d.1} parent=0 // loop_body
    %s14 = ssub.s32 %s9, 1
    %s15 = ssub.s32 %s9, 2
    %s22 = sadd.s32 1, %s17
    %p23 = scmp.ge.s32.totalorder %s22, 1
    %s24 = scalar_select %p23, 0, %s22
    %s25 = sadd.s32 1, %s16
    %s26 = scalar_select %p23, %s25, %s16
    %p27 = scmp.ge.s32.totalorder %s26, 2
    %s28 = scalar_select %p27, 0, %s26
    %s29 = ssub.s32 %s17, %s24
    %p30 = scmp.eq.s32.totalorder %s29, 0
    %s32 = sadd.s32 %s31, 1
    %s33 = scalar_select %p30, %s31, %s32
    %p36 = pneg %p30
    %p37 = scmp.eq.s32.totalorder %s9, 1
    %p38 = por %p36, %p37
    %p39 = scmp.ne.s32.totalorder %s31, %s34
    %p40 = scmp.eq.s32.totalorder %s9, 0
    %p41 = por %p39, %p40
    %p42 = scmp.ne.s32.totalorder %s31, %s34
    %p43 = scmp.eq.s32.totalorder %s14, 1
    %p44 = por %p42, %p43
    %p45 = scmp.ne.s32.totalorder %s34, %s35
    %p46 = scmp.eq.s32.totalorder %s14, 0
    %p47 = por %p45, %p46
    %p48 = scmp.ne.s32.totalorder %s34, %s35
    %p49 = scmp.eq.s32.totalorder %s15, 1
    %p50 = por %p48, %p49
    %p52 = scmp.ne.s32.totalorder %s35, %s51
    %p53 = scmp.eq.s32.totalorder %s15, 0
    %p54 = por %p52, %p53
    %s55 = ssub.s32 %s17, %s24
    %p56 = scmp.eq.s32.totalorder %s55, 0
    %s58 = sadd.s32 %s57, 1
    %s59 = scalar_select %p56, %s57, %s58
    %p62 = pneg %p56
    %p63 = scmp.eq.s32.totalorder %s9, 1
    %p64 = por %p62, %p63
    %p65 = scmp.ne.s32.totalorder %s57, %s60
    %p66 = scmp.eq.s32.totalorder %s9, 0
    %p67 = por %p65, %p66
    %p68 = scmp.ne.s32.totalorder %s57, %s60
    %p69 = scmp.eq.s32.totalorder %s14, 1
    %p70 = por %p68, %p69
    %p71 = scmp.ne.s32.totalorder %s60, %s61
    %p72 = scmp.eq.s32.totalorder %s14, 0
    %p73 = por %p71, %p72
    %p74 = scmp.ne.s32.totalorder %s60, %s61
    %p75 = scmp.eq.s32.totalorder %s15, 1
    %p76 = por %p74, %p75
    %p78 = scmp.ne.s32.totalorder %s61, %s77
    %p79 = scmp.eq.s32.totalorder %s15, 0
    %p80 = por %p78, %p79
    %s81 = ssub.s32 %s16, %s28
    %p82 = scmp.eq.s32.totalorder %s81, 0
    %s84 = sadd.s32 %s83, 1
    %s85 = scalar_select %p82, %s83, %s84
    %p88 = pneg %p82
    %p89 = scmp.eq.s32.totalorder %s9, 1
    %p90 = por %p88, %p89
    %p91 = scmp.ne.s32.totalorder %s83, %s86
    %p92 = scmp.eq.s32.totalorder %s9, 0
    %p93 = por %p91, %p92
    %p94 = scmp.ne.s32.totalorder %s83, %s86
    %p95 = scmp.eq.s32.totalorder %s14, 1
    %p96 = por %p94, %p95
    %p97 = scmp.ne.s32.totalorder %s86, %s87
    %p98 = scmp.eq.s32.totalorder %s14, 0
    %p99 = por %p97, %p98
    %p100 = scmp.ne.s32.totalorder %s86, %s87
    %p101 = scmp.eq.s32.totalorder %s15, 1
    %p102 = por %p100, %p101
    %p104 = scmp.ne.s32.totalorder %s87, %s103
    %p105 = scmp.eq.s32.totalorder %s15, 0
    %p106 = por %p104, %p105
    %s107 = ssub.s32 %s16, %s28
    %s108 = ssub.s32 %s17, %s24
    %s109 = sor.u32 %s107, %s108
    %p110 = scmp.eq.s32.totalorder %s109, 0
    %s112 = sadd.s32 %s111, 1
    %s113 = scalar_select %p110, %s111, %s112
    %p116 = pneg %p110
    %p117 = scmp.eq.s32.totalorder %s9, 1
    %p118 = por %p116, %p117
    %p119 = scmp.ne.s32.totalorder %s111, %s114
    %p120 = scmp.eq.s32.totalorder %s9, 0
    %p121 = por %p119, %p120
    %p122 = scmp.ne.s32.totalorder %s111, %s114
    %p123 = scmp.eq.s32.totalorder %s14, 1
    %p124 = por %p122, %p123
    %p125 = scmp.ne.s32.totalorder %s114, %s115
    %p126 = scmp.eq.s32.totalorder %s14, 0
    %p127 = por %p125, %p126
    %p128 = scmp.ne.s32.totalorder %s114, %s115
    %p129 = scmp.eq.s32.totalorder %s15, 1
    %p130 = por %p128, %p129
    %p132 = scmp.ne.s32.totalorder %s115, %s131
    %p133 = scmp.eq.s32.totalorder %s15, 0
    %p134 = por %p132, %p133
    %p135 = scmp.le.s32.totalorder 1, %s9
    %p136 = scmp.lt.s32.totalorder %s9, 3
    %p137 = pnand %p135, %p136
    %p138 = pneg %p137
    // Predicated region
    $region9: #{complex_conv2d.1} parent=5 // pred_check
      _
    $region10: #{complex_conv2d.1} parent=5 // pred_check_branch
      %140 = sbr.rel (%p137) target = $region12
    $region11: #{complex_conv2d.1} parent=5 // pred_region
      %s141 = ssub.s32 %s9, 1
      // Predicated region
      $region13: #{complex_conv2d.1} parent=11 // pred_check
        %p142 = pneg %p47
      $region14: #{complex_conv2d.1} parent=11 // pred_check_branch
        %144 = sbr.rel (%p142) target = $region16
      $region15: #{complex_conv2d.1} parent=11 // pred_region
        %s145 = smul.u32 2, %s19
        %p146 = scmp.lt.s32.totalorder %s145, 1
        %s147 = scalar_select %p146, %s145, 1
        %s148 = smul.addr %s147, 8
        %s149 = scalar_lea.vmem %s0, %s148
        %s150 = smul.u32 2, %s19
      $region16: #{complex_conv2d.1} parent=11 // pred_fallthru
        _
      // Predicated region
      $region17: #{complex_conv2d.1} parent=11 // pred_check
        %p151 = pneg %p73
      $region18: #{complex_conv2d.1} parent=11 // pred_check_branch
        %153 = sbr.rel (%p151) target = $region20
      $region19: #{complex_conv2d.1} parent=11 // pred_region
        %s154 = smul.u32 2, %s19
        %p155 = scmp.lt.s32.totalorder %s154, 1
        %s156 = scalar_select %p155, %s154, 1
        %s157 = smul.addr %s156, 8
        %s158 = scalar_lea.vmem %s1, %s157
        %s159 = smul.u32 2, %s19
      $region20: #{complex_conv2d.1} parent=11 // pred_fallthru
        _
    $region12: #{complex_conv2d.1} parent=5 // pred_fallthru
      _
    %p160 = scmp.lt.s32.totalorder %s9, 2
    // Predicated region
    $region21: #{complex_conv2d.1} parent=5 // pred_check
      %p161 = pneg %p160
    $region22: #{complex_conv2d.1} parent=5 // pred_check_branch
      %163 = sbr.rel (%p161) target = $region24
    $region23: #{complex_conv2d.1} parent=5 // pred_region
      // Predicated region
      $region25: #{complex_conv2d.1} parent=23 // pred_check
        %p164 = pneg %p93
      $region26: #{complex_conv2d.1} parent=23 // pred_check_branch
        %166 = sbr.rel (%p164) target = $region28
      $region27: #{complex_conv2d.1} parent=23 // pred_region
        %p167 = scmp.lt.s32.totalorder %s16, 1
        %s168 = scalar_select %p167, %s16, 1
        %s169 = smul.addr %s168, 3
        %s170 = smul.addr %s169, 8
        %s171 = scalar_lea.vmem %s2, %s170
      $region28: #{complex_conv2d.1} parent=23 // pred_fallthru
        _
    $region24: #{complex_conv2d.1} parent=5 // pred_fallthru
      _
    %p172 = scmp.le.s32.totalorder 1, %s9
    %p173 = scmp.lt.s32.totalorder %s9, 3
    %p174 = pnand %p172, %p173
    %p175 = pneg %p174
    // Predicated region
    $region29: #{complex_conv2d.1} parent=5 // pred_check
      _
    $region30: #{complex_conv2d.1} parent=5 // pred_check_branch
      %177 = sbr.rel (%p174) target = $region32
    $region31: #{complex_conv2d.1} parent=5 // pred_region
      %s178 = ssub.s32 %s9, 1
      %s179 = smul.u32 2, %s19
      %p180 = scmp.lt.s32.totalorder %s179, 1
      %s181 = scalar_select %p180, %s179, 1
      %s182 = smul.addr %s181, 8
      %s183 = scalar_lea.vmem %s0, %s182
      %p184 = pneg %p47
      %p185 = pneg %p44
      %s186 = smul.u32 2, %s19
      %p187 = scmp.lt.s32.totalorder %s186, 1
      %s188 = scalar_select %p187, %s186, 1
      %s189 = smul.addr %s188, 8
      %s190 = scalar_lea.vmem %s1, %s189
      %p191 = pneg %p73
      %p192 = pneg %p70
      %p193 = scmp.lt.s32.totalorder %s18, 1
      %s194 = scalar_select %p193, %s18, 1
      %s195 = smul.addr %s194, 3
      %s196 = smul.addr %s195, 8
      %s197 = scalar_lea.vmem %s2, %s196
      %p198 = pneg %p99
      %p199 = pneg %p96
      %p200 = pneg %p127
      %p201 = pneg %p124
      %s202 = smul.u32 2, %s19
      %p203 = scmp.lt.s32.totalorder %s18, 1
      %s204 = scalar_select %p203, %s18, 1
      %p205 = scmp.lt.s32.totalorder %s202, 1
      %s206 = scalar_select %p205, %s202, 1
      %s207 = smul.addr %s206, 3
      %s208 = smul.addr %s204, 6
      %s209 = sadd.s32 %s207, %s208
      %s210 = smul.addr %s209, 8
      %s211 = scalar_lea.vmem %s3, %s210
      %s212 = smul.u32 2, %s19
      %p213 = scmp.lt.s32.totalorder %s212, 1
      %s214 = scalar_select %p213, %s212, 1
      %s215 = smul.addr %s214, 8
      %s216 = scalar_lea.vmem %s0, %s215
      %s217 = smul.u32 2, %s19
      %s218 = smul.u32 2, %s19
      %p219 = scmp.lt.s32.totalorder %s218, 1
      %s220 = scalar_select %p219, %s218, 1
      %s221 = smul.addr %s220, 8
      %s222 = scalar_lea.vmem %s1, %s221
      %s223 = smul.u32 2, %s19
      %p224 = scmp.lt.s32.totalorder %s18, 1
      %s225 = scalar_select %p224, %s18, 1
      %s226 = smul.addr %s225, 3
      %s227 = smul.addr %s226, 8
      %s228 = scalar_lea.vmem %s2, %s227
      %s229 = smul.u32 2, %s19
      %p230 = scmp.lt.s32.totalorder %s18, 1
      %s231 = scalar_select %p230, %s18, 1
      %p232 = scmp.lt.s32.totalorder %s229, 1
      %s233 = scalar_select %p232, %s229, 1
      %s234 = smul.addr %s233, 3
      %s235 = smul.addr %s231, 6
      %s236 = sadd.s32 %s234, %s235
      %s237 = smul.addr %s236, 8
      %s238 = scalar_lea.vmem %s3, %s237
      %s239 = smul.u32 2, %s19
      %v240 = vld [vmem:[%s216] sm:$0xff]
      %v241 = vld [vmem:[%s216 + $0x8] sm:$0xff]
      %v242 = vld [vmem:[%s228] sm:$0xff]
      %v243 = vld [vmem:[%s228 + $0x8] sm:$0xff]
      %v244 = vld [vmem:[%s228 + $0x10] sm:$0xff]
      %s245 = scalar_lea.vmem %s216, 16
      %v246 = vld [vmem:[%s245] sm:$0xff]
      %v247 = vld [vmem:[%s245 + $0x8] sm:$0xff]
      %251 = vrot.lane.b32.xlu0 %v242, 127
      %v252 = vpop.permute.xlu0 %251
      %253 = vrot.lane.b32.xlu0 %v243, 127
      %v254 = vpop.permute.xlu0 %253
      %255 = vrot.lane.b32.xlu0 %v244, 127
      %v256 = vpop.permute.xlu0 %255
      %vm257 = vcmask 1039360
      %v258 = vsel %vm257, %v252, %v254
      %v259 = vsel %vm257, %v254, %v256
      %vm263 = vcmask 64512
      %v265 = vsel %vm263, %v246, 0
      %v268 = vsel %vm263, %v247, 0
      %270 = vmatprep.subr.mxu0 0.0
      %271 = vmatpush1.msra.mxu0 0.0
      %272 = vmatprep.subr.mxu0 0.0
      %273 = vmatpush1.msra.mxu0 0.0
      %274 = vmatprep.subr.mxu0 0.0
      %275 = vmatpush1.msra.mxu0 0.0
      %276 = vmatprep.subr.mxu0 0.0
      %277 = vmatpush1.msra.mxu0 0.0
      %278 = vmatprep.subr.mxu0 0.0
      %279 = vmatpush1.msra.mxu0 0.0
      %280 = vmatprep.subr.mxu0 0.0
      %281 = vmatpush1.msra.mxu0 0.0
      %282 = vmatprep.subr.mxu0 0.0
      %283 = vmatpush1.msra.mxu0 0.0
      %284 = vmatprep.subr.mxu0 0.0
      %285 = vmatpush1.msra.mxu0 0.0
      %286 = vmatprep.subr.mxu0 0.0
      %287 = vmatpush1.msra.mxu0 0.0
      %288 = vmatprep.subr.mxu0 0.0
      %289 = vmatpush1.msra.mxu0 0.0
      %290 = vmatprep.subr.mxu0 0.0
      %291 = vmatpush1.msra.mxu0 0.0
      %292 = vmatprep.subr.mxu0 0.0
      %293 = vmatpush1.msra.mxu0 0.0
      %294 = vmatprep.subr.mxu0 0.0
      %295 = vmatpush1.msra.mxu0 0.0
      %296 = vmatprep.subr.mxu0 0.0
      %297 = vmatpush1.msra.mxu0 0.0
      %298 = vmatprep.subr.mxu0 0.0
      %299 = vmatpush1.msra.mxu0 0.0
      %300 = vmatprep.subr.mxu0 %v259
      %301 = vmatpush1.msra.mxu0 %v258
      %302 = vmatprep.subr.mxu0 0.0
      %303 = vmatpush2.msra.mxu0 0.0
      %304 = vmatprep.subr.mxu0 0.0
      %305 = vmatpush2.msra.mxu0 0.0
      %306 = vmatprep.subr.mxu0 0.0
      %307 = vmatpush2.msra.mxu0 0.0
      %308 = vmatprep.subr.mxu0 0.0
      %309 = vmatpush2.msra.mxu0 0.0
      %310 = vmatprep.subr.mxu0 0.0
      %311 = vmatpush2.msra.mxu0 0.0
      %312 = vmatprep.subr.mxu0 0.0
      %313 = vmatpush2.msra.mxu0 0.0
      %314 = vmatprep.subr.mxu0 0.0
      %315 = vmatpush2.msra.mxu0 0.0
      %316 = vmatprep.subr.mxu0 0.0
      %317 = vmatpush2.msra.mxu0 0.0
      %318 = vmatprep.subr.mxu0 0.0
      %319 = vmatpush2.msra.mxu0 0.0
      %320 = vmatprep.subr.mxu0 0.0
      %321 = vmatpush2.msra.mxu0 0.0
      %322 = vmatprep.subr.mxu0 0.0
      %323 = vmatpush2.msra.mxu0 0.0
      %324 = vmatprep.subr.mxu0 0.0
      %325 = vmatpush2.msra.mxu0 0.0
      %326 = vmatprep.subr.mxu0 0.0
      %327 = vmatpush2.msra.mxu0 0.0
      %328 = vmatprep.subr.mxu0 0.0
      %329 = vmatpush2.msra.mxu0 0.0
      %330 = vmatprep.subr.mxu0 0.0
      %331 = vmatpush2.msra.mxu0 0.0
      %332 = vmatprep.subr.mxu0 0.0
      %333 = vmatpush2.msra.mxu0 0.0
      %334 = vmatprep.mubr.f32.mxu0 0.0
      %335 = vmatmul.mubr.f32.gmra.mxu0 %v265
      %v336 = vpop.f32.mrf.mxu0
      %v337 = vadd.f32 0.0, %v336
      %v338 = vpop.f32.mrf.mxu0
      %v339 = vadd.f32 0.0, %v338
      %340 = vmatprep.mubr.f32.mxu0 0.0
      %341 = vmatmul.mubr.f32.gmra.mxu0 %v268
      %v342 = vpop.f32.mrf.mxu0
      %v343 = vadd.f32 0.0, %v342
      %v344 = vpop.f32.mrf.mxu0
      %v345 = vadd.f32 0.0, %v344
      %346 = vdwg.mxu0
      %347 = vmatprep.subr.mxu0 0.0
      %348 = vmatpush1.msra.mxu0 0.0
      %349 = vmatprep.subr.mxu0 0.0
      %350 = vmatpush1.msra.mxu0 0.0
      %351 = vmatprep.subr.mxu0 0.0
      %352 = vmatpush1.msra.mxu0 0.0
      %353 = vmatprep.subr.mxu0 0.0
      %354 = vmatpush1.msra.mxu0 0.0
      %355 = vmatprep.subr.mxu0 0.0
      %356 = vmatpush1.msra.mxu0 0.0
      %357 = vmatprep.subr.mxu0 0.0
      %358 = vmatpush1.msra.mxu0 0.0
      %359 = vmatprep.subr.mxu0 0.0
      %360 = vmatpush1.msra.mxu0 0.0
      %361 = vmatprep.subr.mxu0 0.0
      %362 = vmatpush1.msra.mxu0 0.0
      %363 = vmatprep.subr.mxu0 0.0
      %364 = vmatpush1.msra.mxu0 0.0
      %365 = vmatprep.subr.mxu0 0.0
      %366 = vmatpush1.msra.mxu0 0.0
      %367 = vmatprep.subr.mxu0 0.0
      %368 = vmatpush1.msra.mxu0 0.0
      %369 = vmatprep.subr.mxu0 0.0
      %370 = vmatpush1.msra.mxu0 0.0
      %371 = vmatprep.subr.mxu0 0.0
      %372 = vmatpush1.msra.mxu0 0.0
      %373 = vmatprep.subr.mxu0 0.0
      %374 = vmatpush1.msra.mxu0 0.0
      %375 = vmatprep.subr.mxu0 0.0
      %376 = vmatpush1.msra.mxu0 0.0
      %377 = vmatprep.subr.mxu0 0.0
      %378 = vmatpush1.msra.mxu0 %v256
      %379 = vmatprep.subr.mxu0 0.0
      %380 = vmatpush2.msra.mxu0 0.0
      %381 = vmatprep.subr.mxu0 0.0
      %382 = vmatpush2.msra.mxu0 0.0
      %383 = vmatprep.subr.mxu0 0.0
      %384 = vmatpush2.msra.mxu0 0.0
      %385 = vmatprep.subr.mxu0 0.0
      %386 = vmatpush2.msra.mxu0 0.0
      %387 = vmatprep.subr.mxu0 0.0
      %388 = vmatpush2.msra.mxu0 0.0
      %389 = vmatprep.subr.mxu0 0.0
      %390 = vmatpush2.msra.mxu0 0.0
      %391 = vmatprep.subr.mxu0 0.0
      %392 = vmatpush2.msra.mxu0 0.0
      %393 = vmatprep.subr.mxu0 0.0
      %394 = vmatpush2.msra.mxu0 0.0
      %395 = vmatprep.subr.mxu0 0.0
      %396 = vmatpush2.msra.mxu0 0.0
      %397 = vmatprep.subr.mxu0 0.0
      %398 = vmatpush2.msra.mxu0 0.0
      %399 = vmatprep.subr.mxu0 0.0
      %400 = vmatpush2.msra.mxu0 0.0
      %401 = vmatprep.subr.mxu0 0.0
      %402 = vmatpush2.msra.mxu0 0.0
      %403 = vmatprep.subr.mxu0 0.0
      %404 = vmatpush2.msra.mxu0 0.0
      %405 = vmatprep.subr.mxu0 0.0
      %406 = vmatpush2.msra.mxu0 0.0
      %407 = vmatprep.subr.mxu0 0.0
      %408 = vmatpush2.msra.mxu0 0.0
      %409 = vmatprep.subr.mxu0 0.0
      %410 = vmatpush2.msra.mxu0 0.0
      %411 = vmatprep.mubr.f32.mxu0 0.0
      %412 = vmatmul.mubr.f32.gmra.mxu0 %v265
      %v413 = vpop.f32.mrf.mxu0
      %v414 = vadd.f32 0.0, %v413
      %v415 = vpop.f32.mrf.mxu0
      %416 = vmatprep.mubr.f32.mxu0 0.0
      %417 = vmatmul.mubr.f32.gmra.mxu0 %v268
      %v418 = vpop.f32.mrf.mxu0
      %v419 = vadd.f32 0.0, %v418
      %v420 = vpop.f32.mrf.mxu0
      %421 = vdwg.mxu0
      %v423 = vsel %vm263, %v240, 0
      %v426 = vsel %vm263, %v241, 0
      %428 = vmatprep.subr.mxu0 0.0
      %429 = vmatpush1.msra.mxu0 0.0
      %430 = vmatprep.subr.mxu0 0.0
      %431 = vmatpush1.msra.mxu0 0.0
      %432 = vmatprep.subr.mxu0 0.0
      %433 = vmatpush1.msra.mxu0 0.0
      %434 = vmatprep.subr.mxu0 0.0
      %435 = vmatpush1.msra.mxu0 0.0
      %436 = vmatprep.subr.mxu0 0.0
      %437 = vmatpush1.msra.mxu0 0.0
      %438 = vmatprep.subr.mxu0 0.0
      %439 = vmatpush1.msra.mxu0 0.0
      %440 = vmatprep.subr.mxu0 0.0
      %441 = vmatpush1.msra.mxu0 0.0
      %442 = vmatprep.subr.mxu0 0.0
      %443 = vmatpush1.msra.mxu0 0.0
      %444 = vmatprep.subr.mxu0 0.0
      %445 = vmatpush1.msra.mxu0 0.0
      %446 = vmatprep.subr.mxu0 0.0
      %447 = vmatpush1.msra.mxu0 0.0
      %448 = vmatprep.subr.mxu0 0.0
      %449 = vmatpush1.msra.mxu0 0.0
      %450 = vmatprep.subr.mxu0 0.0
      %451 = vmatpush1.msra.mxu0 0.0
      %452 = vmatprep.subr.mxu0 0.0
      %453 = vmatpush1.msra.mxu0 0.0
      %454 = vmatprep.subr.mxu0 0.0
      %455 = vmatpush1.msra.mxu0 0.0
      %456 = vmatprep.subr.mxu0 0.0
      %457 = vmatpush1.msra.mxu0 0.0
      %458 = vmatprep.subr.mxu0 %v243
      %459 = vmatpush1.msra.mxu0 %v242
      %460 = vmatprep.subr.mxu0 0.0
      %461 = vmatpush2.msra.mxu0 0.0
      %462 = vmatprep.subr.mxu0 0.0
      %463 = vmatpush2.msra.mxu0 0.0
      %464 = vmatprep.subr.mxu0 0.0
      %465 = vmatpush2.msra.mxu0 0.0
      %466 = vmatprep.subr.mxu0 0.0
      %467 = vmatpush2.msra.mxu0 0.0
      %468 = vmatprep.subr.mxu0 0.0
      %469 = vmatpush2.msra.mxu0 0.0
      %470 = vmatprep.subr.mxu0 0.0
      %471 = vmatpush2.msra.mxu0 0.0
      %472 = vmatprep.subr.mxu0 0.0
      %473 = vmatpush2.msra.mxu0 0.0
      %474 = vmatprep.subr.mxu0 0.0
      %475 = vmatpush2.msra.mxu0 0.0
      %476 = vmatprep.subr.mxu0 0.0
      %477 = vmatpush2.msra.mxu0 0.0
      %478 = vmatprep.subr.mxu0 0.0
      %479 = vmatpush2.msra.mxu0 0.0
      %480 = vmatprep.subr.mxu0 0.0
      %481 = vmatpush2.msra.mxu0 0.0
      %482 = vmatprep.subr.mxu0 0.0
      %483 = vmatpush2.msra.mxu0 0.0
      %484 = vmatprep.subr.mxu0 0.0
      %485 = vmatpush2.msra.mxu0 0.0
      %486 = vmatprep.subr.mxu0 0.0
      %487 = vmatpush2.msra.mxu0 0.0
      %488 = vmatprep.subr.mxu0 0.0
      %489 = vmatpush2.msra.mxu0 0.0
      %490 = vmatprep.subr.mxu0 0.0
      %491 = vmatpush2.msra.mxu0 0.0
      %492 = vmatprep.mubr.f32.mxu0 0.0
      %493 = vmatmul.mubr.f32.gmra.mxu0 %v423
      %v494 = vpop.f32.mrf.mxu0
      %v495 = vadd.f32 %v337, %v494
      %v496 = vpop.f32.mrf.mxu0
      %v497 = vadd.f32 %v339, %v496
      %498 = vmatprep.mubr.f32.mxu0 0.0
      %499 = vmatmul.mubr.f32.gmra.mxu0 %v426
      %v500 = vpop.f32.mrf.mxu0
      %v501 = vadd.f32 %v343, %v500
      %v502 = vpop.f32.mrf.mxu0
      %v503 = vadd.f32 %v345, %v502
      %504 = vdwg.mxu0
      %505 = vmatprep.subr.mxu0 0.0
      %506 = vmatpush1.msra.mxu0 0.0
      %507 = vmatprep.subr.mxu0 0.0
      %508 = vmatpush1.msra.mxu0 0.0
      %509 = vmatprep.subr.mxu0 0.0
      %510 = vmatpush1.msra.mxu0 0.0
      %511 = vmatprep.subr.mxu0 0.0
      %512 = vmatpush1.msra.mxu0 0.0
      %513 = vmatprep.subr.mxu0 0.0
      %514 = vmatpush1.msra.mxu0 0.0
      %515 = vmatprep.subr.mxu0 0.0
      %516 = vmatpush1.msra.mxu0 0.0
      %517 = vmatprep.subr.mxu0 0.0
      %518 = vmatpush1.msra.mxu0 0.0
      %519 = vmatprep.subr.mxu0 0.0
      %520 = vmatpush1.msra.mxu0 0.0
      %521 = vmatprep.subr.mxu0 0.0
      %522 = vmatpush1.msra.mxu0 0.0
      %523 = vmatprep.subr.mxu0 0.0
      %524 = vmatpush1.msra.mxu0 0.0
      %525 = vmatprep.subr.mxu0 0.0
      %526 = vmatpush1.msra.mxu0 0.0
      %527 = vmatprep.subr.mxu0 0.0
      %528 = vmatpush1.msra.mxu0 0.0
      %529 = vmatprep.subr.mxu0 0.0
      %530 = vmatpush1.msra.mxu0 0.0
      %531 = vmatprep.subr.mxu0 0.0
      %532 = vmatpush1.msra.mxu0 0.0
      %533 = vmatprep.subr.mxu0 0.0
      %534 = vmatpush1.msra.mxu0 0.0
      %535 = vmatprep.subr.mxu0 0.0
      %536 = vmatpush1.msra.mxu0 %v244
      %537 = vmatprep.subr.mxu0 0.0
      %538 = vmatpush2.msra.mxu0 0.0
      %539 = vmatprep.subr.mxu0 0.0
      %540 = vmatpush2.msra.mxu0 0.0
      %541 = vmatprep.subr.mxu0 0.0
      %542 = vmatpush2.msra.mxu0 0.0
      %543 = vmatprep.subr.mxu0 0.0
      %544 = vmatpush2.msra.mxu0 0.0
      %545 = vmatprep.subr.mxu0 0.0
      %546 = vmatpush2.msra.mxu0 0.0
      %547 = vmatprep.subr.mxu0 0.0
      %548 = vmatpush2.msra.mxu0 0.0
      %549 = vmatprep.subr.mxu0 0.0
      %550 = vmatpush2.msra.mxu0 0.0
      %551 = vmatprep.subr.mxu0 0.0
      %552 = vmatpush2.msra.mxu0 0.0
      %553 = vmatprep.subr.mxu0 0.0
      %554 = vmatpush2.msra.mxu0 0.0
      %555 = vmatprep.subr.mxu0 0.0
      %556 = vmatpush2.msra.mxu0 0.0
      %557 = vmatprep.subr.mxu0 0.0
      %558 = vmatpush2.msra.mxu0 0.0
      %559 = vmatprep.subr.mxu0 0.0
      %560 = vmatpush2.msra.mxu0 0.0
      %561 = vmatprep.subr.mxu0 0.0
      %562 = vmatpush2.msra.mxu0 0.0
      %563 = vmatprep.subr.mxu0 0.0
      %564 = vmatpush2.msra.mxu0 0.0
      %565 = vmatprep.subr.mxu0 0.0
      %566 = vmatpush2.msra.mxu0 0.0
      %567 = vmatprep.subr.mxu0 0.0
      %568 = vmatpush2.msra.mxu0 0.0
      %569 = vmatprep.mubr.f32.mxu0 0.0
      %570 = vmatmul.mubr.f32.gmra.mxu0 %v423
      %v571 = vpop.f32.mrf.mxu0
      %v572 = vadd.f32 %v414, %v571
      %v573 = vpop.f32.mrf.mxu0
      %574 = vmatprep.mubr.f32.mxu0 0.0
      %575 = vmatmul.mubr.f32.gmra.mxu0 %v426
      %v576 = vpop.f32.mrf.mxu0
      %v577 = vadd.f32 %v419, %v576
      %v578 = vpop.f32.mrf.mxu0
      %579 = vdwg.mxu0
      %s580 = scalar_lea.vmem %s216, 32
      %v581 = vld [vmem:[%s580] sm:$0xff]
      %v582 = vld [vmem:[%s580 + $0x8] sm:$0xff]
      %583 = vrot.lane.b32.xlu0 %v242, 126
      %v584 = vpop.permute.xlu0 %583
      %585 = vrot.lane.b32.xlu0 %v243, 126
      %v586 = vpop.permute.xlu0 %585
      %587 = vrot.lane.b32.xlu0 %v244, 126
      %v588 = vpop.permute.xlu0 %587
      %vm589 = vcmask 1031168
      %v590 = vsel %vm589, %v584, %v586
      %v591 = vsel %vm589, %v586, %v588
      %v596 = vsel %vm263, %v581, 0
      %v599 = vsel %vm263, %v582, 0
      %601 = vmatprep.subr.mxu0 0.0
      %602 = vmatpush1.msra.mxu0 0.0
      %603 = vmatprep.subr.mxu0 0.0
      %604 = vmatpush1.msra.mxu0 0.0
      %605 = vmatprep.subr.mxu0 0.0
      %606 = vmatpush1.msra.mxu0 0.0
      %607 = vmatprep.subr.mxu0 0.0
      %608 = vmatpush1.msra.mxu0 0.0
      %609 = vmatprep.subr.mxu0 0.0
      %610 = vmatpush1.msra.mxu0 0.0
      %611 = vmatprep.subr.mxu0 0.0
      %612 = vmatpush1.msra.mxu0 0.0
      %613 = vmatprep.subr.mxu0 0.0
      %614 = vmatpush1.msra.mxu0 0.0
      %615 = vmatprep.subr.mxu0 0.0
      %616 = vmatpush1.msra.mxu0 0.0
      %617 = vmatprep.subr.mxu0 0.0
      %618 = vmatpush1.msra.mxu0 0.0
      %619 = vmatprep.subr.mxu0 0.0
      %620 = vmatpush1.msra.mxu0 0.0
      %621 = vmatprep.subr.mxu0 0.0
      %622 = vmatpush1.msra.mxu0 0.0
      %623 = vmatprep.subr.mxu0 0.0
      %624 = vmatpush1.msra.mxu0 0.0
      %625 = vmatprep.subr.mxu0 0.0
      %626 = vmatpush1.msra.mxu0 0.0
      %627 = vmatprep.subr.mxu0 0.0
      %628 = vmatpush1.msra.mxu0 0.0
      %629 = vmatprep.subr.mxu0 0.0
      %630 = vmatpush1.msra.mxu0 0.0
      %631 = vmatprep.subr.mxu0 %v591
      %632 = vmatpush1.msra.mxu0 %v590
      %633 = vmatprep.subr.mxu0 0.0
      %634 = vmatpush2.msra.mxu0 0.0
      %635 = vmatprep.subr.mxu0 0.0
      %636 = vmatpush2.msra.mxu0 0.0
      %637 = vmatprep.subr.mxu0 0.0
      %638 = vmatpush2.msra.mxu0 0.0
      %639 = vmatprep.subr.mxu0 0.0
      %640 = vmatpush2.msra.mxu0 0.0
      %641 = vmatprep.subr.mxu0 0.0
      %642 = vmatpush2.msra.mxu0 0.0
      %643 = vmatprep.subr.mxu0 0.0
      %644 = vmatpush2.msra.mxu0 0.0
      %645 = vmatprep.subr.mxu0 0.0
      %646 = vmatpush2.msra.mxu0 0.0
      %647 = vmatprep.subr.mxu0 0.0
      %648 = vmatpush2.msra.mxu0 0.0
      %649 = vmatprep.subr.mxu0 0.0
      %650 = vmatpush2.msra.mxu0 0.0
      %651 = vmatprep.subr.mxu0 0.0
      %652 = vmatpush2.msra.mxu0 0.0
      %653 = vmatprep.subr.mxu0 0.0
      %654 = vmatpush2.msra.mxu0 0.0
      %655 = vmatprep.subr.mxu0 0.0
      %656 = vmatpush2.msra.mxu0 0.0
      %657 = vmatprep.subr.mxu0 0.0
      %658 = vmatpush2.msra.mxu0 0.0
      %659 = vmatprep.subr.mxu0 0.0
      %660 = vmatpush2.msra.mxu0 0.0
      %661 = vmatprep.subr.mxu0 0.0
      %662 = vmatpush2.msra.mxu0 0.0
      %663 = vmatprep.subr.mxu0 0.0
      %664 = vmatpush2.msra.mxu0 0.0
      %665 = vmatprep.mubr.f32.mxu0 0.0
      %666 = vmatmul.mubr.f32.gmra.mxu0 %v596
      %v667 = vpop.f32.mrf.mxu0
      %v668 = vadd.f32 0.0, %v667
      %v669 = vpop.f32.mrf.mxu0
      %v670 = vadd.f32 0.0, %v669
      %671 = vmatprep.mubr.f32.mxu0 0.0
      %672 = vmatmul.mubr.f32.gmra.mxu0 %v599
      %v673 = vpop.f32.mrf.mxu0
      %v674 = vadd.f32 0.0, %v673
      %v675 = vpop.f32.mrf.mxu0
      %v676 = vadd.f32 0.0, %v675
      %677 = vdwg.mxu0
      %678 = vmatprep.subr.mxu0 0.0
      %679 = vmatpush1.msra.mxu0 0.0
      %680 = vmatprep.subr.mxu0 0.0
      %681 = vmatpush1.msra.mxu0 0.0
      %682 = vmatprep.subr.mxu0 0.0
      %683 = vmatpush1.msra.mxu0 0.0
      %684 = vmatprep.subr.mxu0 0.0
      %685 = vmatpush1.msra.mxu0 0.0
      %686 = vmatprep.subr.mxu0 0.0
      %687 = vmatpush1.msra.mxu0 0.0
      %688 = vmatprep.subr.mxu0 0.0
      %689 = vmatpush1.msra.mxu0 0.0
      %690 = vmatprep.subr.mxu0 0.0
      %691 = vmatpush1.msra.mxu0 0.0
      %692 = vmatprep.subr.mxu0 0.0
      %693 = vmatpush1.msra.mxu0 0.0
      %694 = vmatprep.subr.mxu0 0.0
      %695 = vmatpush1.msra.mxu0 0.0
      %696 = vmatprep.subr.mxu0 0.0
      %697 = vmatpush1.msra.mxu0 0.0
      %698 = vmatprep.subr.mxu0 0.0
      %699 = vmatpush1.msra.mxu0 0.0
      %700 = vmatprep.subr.mxu0 0.0
      %701 = vmatpush1.msra.mxu0 0.0
      %702 = vmatprep.subr.mxu0 0.0
      %703 = vmatpush1.msra.mxu0 0.0
      %704 = vmatprep.subr.mxu0 0.0
      %705 = vmatpush1.msra.mxu0 0.0
      %706 = vmatprep.subr.mxu0 0.0
      %707 = vmatpush1.msra.mxu0 0.0
      %708 = vmatprep.subr.mxu0 0.0
      %709 = vmatpush1.msra.mxu0 %v588
      %710 = vmatprep.subr.mxu0 0.0
      %711 = vmatpush2.msra.mxu0 0.0
      %712 = vmatprep.subr.mxu0 0.0
      %713 = vmatpush2.msra.mxu0 0.0
      %714 = vmatprep.subr.mxu0 0.0
      %715 = vmatpush2.msra.mxu0 0.0
      %716 = vmatprep.subr.mxu0 0.0
      %717 = vmatpush2.msra.mxu0 0.0
      %718 = vmatprep.subr.mxu0 0.0
      %719 = vmatpush2.msra.mxu0 0.0
      %720 = vmatprep.subr.mxu0 0.0
      %721 = vmatpush2.msra.mxu0 0.0
      %722 = vmatprep.subr.mxu0 0.0
      %723 = vmatpush2.msra.mxu0 0.0
      %724 = vmatprep.subr.mxu0 0.0
      %725 = vmatpush2.msra.mxu0 0.0
      %726 = vmatprep.subr.mxu0 0.0
      %727 = vmatpush2.msra.mxu0 0.0
      %728 = vmatprep.subr.mxu0 0.0
      %729 = vmatpush2.msra.mxu0 0.0
      %730 = vmatprep.subr.mxu0 0.0
      %731 = vmatpush2.msra.mxu0 0.0
      %732 = vmatprep.subr.mxu0 0.0
      %733 = vmatpush2.msra.mxu0 0.0
      %734 = vmatprep.subr.mxu0 0.0
      %735 = vmatpush2.msra.mxu0 0.0
      %736 = vmatprep.subr.mxu0 0.0
      %737 = vmatpush2.msra.mxu0 0.0
      %738 = vmatprep.subr.mxu0 0.0
      %739 = vmatpush2.msra.mxu0 0.0
      %740 = vmatprep.subr.mxu0 0.0
      %741 = vmatpush2.msra.mxu0 0.0
      %742 = vmatprep.mubr.f32.mxu0 0.0
      %743 = vmatmul.mubr.f32.gmra.mxu0 %v596
      %v744 = vpop.f32.mrf.mxu0
      %v745 = vadd.f32 0.0, %v744
      %v746 = vpop.f32.mrf.mxu0
      %747 = vmatprep.mubr.f32.mxu0 0.0
      %748 = vmatmul.mubr.f32.gmra.mxu0 %v599
      %v749 = vpop.f32.mrf.mxu0
      %v750 = vadd.f32 0.0, %v749
      %v751 = vpop.f32.mrf.mxu0
      %752 = vdwg.mxu0
      %v753 = vadd.f32 %v495, %v668
      %v754 = vadd.f32 %v497, %v670
      %v755 = vadd.f32 %v572, %v745
      %v756 = vadd.f32 %v501, %v674
      %v757 = vadd.f32 %v503, %v676
      %v758 = vadd.f32 %v577, %v750
      %s759 = scalar_lea.vmem %s216, 48
      %v760 = vld [vmem:[%s759] sm:$0xff]
      %v761 = vld [vmem:[%s759 + $0x8] sm:$0xff]
      %762 = vrot.lane.b32.xlu0 %v242, 110
      %v763 = vpop.permute.xlu0 %762
      %764 = vrot.lane.b32.xlu0 %v243, 110
      %v765 = vpop.permute.xlu0 %764
      %766 = vrot.lane.b32.xlu0 %v244, 110
      %v767 = vpop.permute.xlu0 %766
      %vm768 = vcmask 900096
      %v769 = vsel %vm768, %v763, %v765
      %v770 = vsel %vm768, %v765, %v767
      %v775 = vsel %vm263, %v760, 0
      %v778 = vsel %vm263, %v761, 0
      %780 = vmatprep.subr.mxu0 0.0
      %781 = vmatpush1.msra.mxu0 0.0
      %782 = vmatprep.subr.mxu0 0.0
      %783 = vmatpush1.msra.mxu0 0.0
      %784 = vmatprep.subr.mxu0 0.0
      %785 = vmatpush1.msra.mxu0 0.0
      %786 = vmatprep.subr.mxu0 0.0
      %787 = vmatpush1.msra.mxu0 0.0
      %788 = vmatprep.subr.mxu0 0.0
      %789 = vmatpush1.msra.mxu0 0.0
      %790 = vmatprep.subr.mxu0 0.0
      %791 = vmatpush1.msra.mxu0 0.0
      %792 = vmatprep.subr.mxu0 0.0
      %793 = vmatpush1.msra.mxu0 0.0
      %794 = vmatprep.subr.mxu0 0.0
      %795 = vmatpush1.msra.mxu0 0.0
      %796 = vmatprep.subr.mxu0 0.0
      %797 = vmatpush1.msra.mxu0 0.0
      %798 = vmatprep.subr.mxu0 0.0
      %799 = vmatpush1.msra.mxu0 0.0
      %800 = vmatprep.subr.mxu0 0.0
      %801 = vmatpush1.msra.mxu0 0.0
      %802 = vmatprep.subr.mxu0 0.0
      %803 = vmatpush1.msra.mxu0 0.0
      %804 = vmatprep.subr.mxu0 0.0
      %805 = vmatpush1.msra.mxu0 0.0
      %806 = vmatprep.subr.mxu0 0.0
      %807 = vmatpush1.msra.mxu0 0.0
      %808 = vmatprep.subr.mxu0 0.0
      %809 = vmatpush1.msra.mxu0 0.0
      %810 = vmatprep.subr.mxu0 %v770
      %811 = vmatpush1.msra.mxu0 %v769
      %812 = vmatprep.subr.mxu0 0.0
      %813 = vmatpush2.msra.mxu0 0.0
      %814 = vmatprep.subr.mxu0 0.0
      %815 = vmatpush2.msra.mxu0 0.0
      %816 = vmatprep.subr.mxu0 0.0
      %817 = vmatpush2.msra.mxu0 0.0
      %818 = vmatprep.subr.mxu0 0.0
      %819 = vmatpush2.msra.mxu0 0.0
      %820 = vmatprep.subr.mxu0 0.0
      %821 = vmatpush2.msra.mxu0 0.0
      %822 = vmatprep.subr.mxu0 0.0
      %823 = vmatpush2.msra.mxu0 0.0
      %824 = vmatprep.subr.mxu0 0.0
      %825 = vmatpush2.msra.mxu0 0.0
      %826 = vmatprep.subr.mxu0 0.0
      %827 = vmatpush2.msra.mxu0 0.0
      %828 = vmatprep.subr.mxu0 0.0
      %829 = vmatpush2.msra.mxu0 0.0
      %830 = vmatprep.subr.mxu0 0.0
      %831 = vmatpush2.msra.mxu0 0.0
      %832 = vmatprep.subr.mxu0 0.0
      %833 = vmatpush2.msra.mxu0 0.0
      %834 = vmatprep.subr.mxu0 0.0
      %835 = vmatpush2.msra.mxu0 0.0
      %836 = vmatprep.subr.mxu0 0.0
      %837 = vmatpush2.msra.mxu0 0.0
      %838 = vmatprep.subr.mxu0 0.0
      %839 = vmatpush2.msra.mxu0 0.0
      %840 = vmatprep.subr.mxu0 0.0
      %841 = vmatpush2.msra.mxu0 0.0
      %842 = vmatprep.subr.mxu0 0.0
      %843 = vmatpush2.msra.mxu0 0.0
      %844 = vmatprep.mubr.f32.mxu0 0.0
      %845 = vmatmul.mubr.f32.gmra.mxu0 %v775
      %v846 = vpop.f32.mrf.mxu0
      %v847 = vadd.f32 0.0, %v846
      %v848 = vpop.f32.mrf.mxu0
      %v849 = vadd.f32 0.0, %v848
      %850 = vmatprep.mubr.f32.mxu0 0.0
      %851 = vmatmul.mubr.f32.gmra.mxu0 %v778
      %v852 = vpop.f32.mrf.mxu0
      %v853 = vadd.f32 0.0, %v852
      %v854 = vpop.f32.mrf.mxu0
      %v855 = vadd.f32 0.0, %v854
      %856 = vdwg.mxu0
      %857 = vmatprep.subr.mxu0 0.0
      %858 = vmatpush1.msra.mxu0 0.0
      %859 = vmatprep.subr.mxu0 0.0
      %860 = vmatpush1.msra.mxu0 0.0
      %861 = vmatprep.subr.mxu0 0.0
      %862 = vmatpush1.msra.mxu0 0.0
      %863 = vmatprep.subr.mxu0 0.0
      %864 = vmatpush1.msra.mxu0 0.0
      %865 = vmatprep.subr.mxu0 0.0
      %866 = vmatpush1.msra.mxu0 0.0
      %867 = vmatprep.subr.mxu0 0.0
      %868 = vmatpush1.msra.mxu0 0.0
      %869 = vmatprep.subr.mxu0 0.0
      %870 = vmatpush1.msra.mxu0 0.0
      %871 = vmatprep.subr.mxu0 0.0
      %872 = vmatpush1.msra.mxu0 0.0
      %873 = vmatprep.subr.mxu0 0.0
      %874 = vmatpush1.msra.mxu0 0.0
      %875 = vmatprep.subr.mxu0 0.0
      %876 = vmatpush1.msra.mxu0 0.0
      %877 = vmatprep.subr.mxu0 0.0
      %878 = vmatpush1.msra.mxu0 0.0
      %879 = vmatprep.subr.mxu0 0.0
      %880 = vmatpush1.msra.mxu0 0.0
      %881 = vmatprep.subr.mxu0 0.0
      %882 = vmatpush1.msra.mxu0 0.0
      %883 = vmatprep.subr.mxu0 0.0
      %884 = vmatpush1.msra.mxu0 0.0
      %885 = vmatprep.subr.mxu0 0.0
      %886 = vmatpush1.msra.mxu0 0.0
      %887 = vmatprep.subr.mxu0 0.0
      %888 = vmatpush1.msra.mxu0 %v767
      %889 = vmatprep.subr.mxu0 0.0
      %890 = vmatpush2.msra.mxu0 0.0
      %891 = vmatprep.subr.mxu0 0.0
      %892 = vmatpush2.msra.mxu0 0.0
      %893 = vmatprep.subr.mxu0 0.0
      %894 = vmatpush2.msra.mxu0 0.0
      %895 = vmatprep.subr.mxu0 0.0
      %896 = vmatpush2.msra.mxu0 0.0
      %897 = vmatprep.subr.mxu0 0.0
      %898 = vmatpush2.msra.mxu0 0.0
      %899 = vmatprep.subr.mxu0 0.0
      %900 = vmatpush2.msra.mxu0 0.0
      %901 = vmatprep.subr.mxu0 0.0
      %902 = vmatpush2.msra.mxu0 0.0
      %903 = vmatprep.subr.mxu0 0.0
      %904 = vmatpush2.msra.mxu0 0.0
      %905 = vmatprep.subr.mxu0 0.0
      %906 = vmatpush2.msra.mxu0 0.0
      %907 = vmatprep.subr.mxu0 0.0
      %908 = vmatpush2.msra.mxu0 0.0
      %909 = vmatprep.subr.mxu0 0.0
      %910 = vmatpush2.msra.mxu0 0.0
      %911 = vmatprep.subr.mxu0 0.0
      %912 = vmatpush2.msra.mxu0 0.0
      %913 = vmatprep.subr.mxu0 0.0
      %914 = vmatpush2.msra.mxu0 0.0
      %915 = vmatprep.subr.mxu0 0.0
      %916 = vmatpush2.msra.mxu0 0.0
      %917 = vmatprep.subr.mxu0 0.0
      %918 = vmatpush2.msra.mxu0 0.0
      %919 = vmatprep.subr.mxu0 0.0
      %920 = vmatpush2.msra.mxu0 0.0
      %921 = vmatprep.mubr.f32.mxu0 0.0
      %922 = vmatmul.mubr.f32.gmra.mxu0 %v775
      %v923 = vpop.f32.mrf.mxu0
      %v924 = vadd.f32 0.0, %v923
      %v925 = vpop.f32.mrf.mxu0
      %926 = vmatprep.mubr.f32.mxu0 0.0
      %927 = vmatmul.mubr.f32.gmra.mxu0 %v778
      %v928 = vpop.f32.mrf.mxu0
      %v929 = vadd.f32 0.0, %v928
      %v930 = vpop.f32.mrf.mxu0
      %931 = vdwg.mxu0
      %v932 = vadd.f32 %v753, %v847
      %v933 = vadd.f32 %v754, %v849
      %v934 = vadd.f32 %v755, %v924
      %v935 = vadd.f32 %v756, %v853
      %v936 = vadd.f32 %v757, %v855
      %v937 = vadd.f32 %v758, %v929
      %s938 = scalar_lea.vmem %s216, 64
      %v939 = vld [vmem:[%s938] sm:$0xff]
      %v940 = vld [vmem:[%s938 + $0x8] sm:$0xff]
      %941 = vrot.lane.b32.xlu0 %v242, 109
      %v942 = vpop.permute.xlu0 %941
      %943 = vrot.lane.b32.xlu0 %v243, 109
      %v944 = vpop.permute.xlu0 %943
      %945 = vrot.lane.b32.xlu0 %v244, 109
      %v946 = vpop.permute.xlu0 %945
      %vm947 = vcmask 891904
      %v948 = vsel %vm947, %v942, %v944
      %v949 = vsel %vm947, %v944, %v946
      %v954 = vsel %vm263, %v939, 0
      %v957 = vsel %vm263, %v940, 0
      %959 = vmatprep.subr.mxu0 0.0
      %960 = vmatpush1.msra.mxu0 0.0
      %961 = vmatprep.subr.mxu0 0.0
      %962 = vmatpush1.msra.mxu0 0.0
      %963 = vmatprep.subr.mxu0 0.0
      %964 = vmatpush1.msra.mxu0 0.0
      %965 = vmatprep.subr.mxu0 0.0
      %966 = vmatpush1.msra.mxu0 0.0
      %967 = vmatprep.subr.mxu0 0.0
      %968 = vmatpush1.msra.mxu0 0.0
      %969 = vmatprep.subr.mxu0 0.0
      %970 = vmatpush1.msra.mxu0 0.0
      %971 = vmatprep.subr.mxu0 0.0
      %972 = vmatpush1.msra.mxu0 0.0
      %973 = vmatprep.subr.mxu0 0.0
      %974 = vmatpush1.msra.mxu0 0.0
      %975 = vmatprep.subr.mxu0 0.0
      %976 = vmatpush1.msra.mxu0 0.0
      %977 = vmatprep.subr.mxu0 0.0
      %978 = vmatpush1.msra.mxu0 0.0
      %979 = vmatprep.subr.mxu0 0.0
      %980 = vmatpush1.msra.mxu0 0.0
      %981 = vmatprep.subr.mxu0 0.0
      %982 = vmatpush1.msra.mxu0 0.0
      %983 = vmatprep.subr.mxu0 0.0
      %984 = vmatpush1.msra.mxu0 0.0
      %985 = vmatprep.subr.mxu0 0.0
      %986 = vmatpush1.msra.mxu0 0.0
      %987 = vmatprep.subr.mxu0 0.0
      %988 = vmatpush1.msra.mxu0 0.0
      %989 = vmatprep.subr.mxu0 %v949
      %990 = vmatpush1.msra.mxu0 %v948
      %991 = vmatprep.subr.mxu0 0.0
      %992 = vmatpush2.msra.mxu0 0.0
      %993 = vmatprep.subr.mxu0 0.0
      %994 = vmatpush2.msra.mxu0 0.0
      %995 = vmatprep.subr.mxu0 0.0
      %996 = vmatpush2.msra.mxu0 0.0
      %997 = vmatprep.subr.mxu0 0.0
      %998 = vmatpush2.msra.mxu0 0.0
      %999 = vmatprep.subr.mxu0 0.0
      %1000 = vmatpush2.msra.mxu0 0.0
      %1001 = vmatprep.subr.mxu0 0.0
      %1002 = vmatpush2.msra.mxu0 0.0
      %1003 = vmatprep.subr.mxu0 0.0
      %1004 = vmatpush2.msra.mxu0 0.0
      %1005 = vmatprep.subr.mxu0 0.0
      %1006 = vmatpush2.msra.mxu0 0.0
      %1007 = vmatprep.subr.mxu0 0.0
      %1008 = vmatpush2.msra.mxu0 0.0
      %1009 = vmatprep.subr.mxu0 0.0
      %1010 = vmatpush2.msra.mxu0 0.0
      %1011 = vmatprep.subr.mxu0 0.0
      %1012 = vmatpush2.msra.mxu0 0.0
      %1013 = vmatprep.subr.mxu0 0.0
      %1014 = vmatpush2.msra.mxu0 0.0
      %1015 = vmatprep.subr.mxu0 0.0
      %1016 = vmatpush2.msra.mxu0 0.0
      %1017 = vmatprep.subr.mxu0 0.0
      %1018 = vmatpush2.msra.mxu0 0.0
      %1019 = vmatprep.subr.mxu0 0.0
      %1020 = vmatpush2.msra.mxu0 0.0
      %1021 = vmatprep.subr.mxu0 0.0
      %1022 = vmatpush2.msra.mxu0 0.0
      %1023 = vmatprep.mubr.f32.mxu0 0.0
      %1024 = vmatmul.mubr.f32.gmra.mxu0 %v954
      %v1025 = vpop.f32.mrf.mxu0
      %v1026 = vadd.f32 0.0, %v1025
      %v1027 = vpop.f32.mrf.mxu0
      %v1028 = vadd.f32 0.0, %v1027
      %1029 = vmatprep.mubr.f32.mxu0 0.0
      %1030 = vmatmul.mubr.f32.gmra.mxu0 %v957
      %v1031 = vpop.f32.mrf.mxu0
      %v1032 = vadd.f32 0.0, %v1031
      %v1033 = vpop.f32.mrf.mxu0
      %v1034 = vadd.f32 0.0, %v1033
      %1035 = vdwg.mxu0
      %1036 = vmatprep.subr.mxu0 0.0
      %1037 = vmatpush1.msra.mxu0 0.0
      %1038 = vmatprep.subr.mxu0 0.0
      %1039 = vmatpush1.msra.mxu0 0.0
      %1040 = vmatprep.subr.mxu0 0.0
      %1041 = vmatpush1.msra.mxu0 0.0
      %1042 = vmatprep.subr.mxu0 0.0
      %1043 = vmatpush1.msra.mxu0 0.0
      %1044 = vmatprep.subr.mxu0 0.0
      %1045 = vmatpush1.msra.mxu0 0.0
      %1046 = vmatprep.subr.mxu0 0.0
      %1047 = vmatpush1.msra.mxu0 0.0
      %1048 = vmatprep.subr.mxu0 0.0
      %1049 = vmatpush1.msra.mxu0 0.0
      %1050 = vmatprep.subr.mxu0 0.0
      %1051 = vmatpush1.msra.mxu0 0.0
      %1052 = vmatprep.subr.mxu0 0.0
      %1053 = vmatpush1.msra.mxu0 0.0
      %1054 = vmatprep.subr.mxu0 0.0
      %1055 = vmatpush1.msra.mxu0 0.0
      %1056 = vmatprep.subr.mxu0 0.0
      %1057 = vmatpush1.msra.mxu0 0.0
      %1058 = vmatprep.subr.mxu0 0.0
      %1059 = vmatpush1.msra.mxu0 0.0
      %1060 = vmatprep.subr.mxu0 0.0
      %1061 = vmatpush1.msra.mxu0 0.0
      %1062 = vmatprep.subr.mxu0 0.0
      %1063 = vmatpush1.msra.mxu0 0.0
      %1064 = vmatprep.subr.mxu0 0.0
      %1065 = vmatpush1.msra.mxu0 0.0
      %1066 = vmatprep.subr.mxu0 0.0
      %1067 = vmatpush1.msra.mxu0 %v946
      %1068 = vmatprep.subr.mxu0 0.0
      %1069 = vmatpush2.msra.mxu0 0.0
      %1070 = vmatprep.subr.mxu0 0.0
      %1071 = vmatpush2.msra.mxu0 0.0
      %1072 = vmatprep.subr.mxu0 0.0
      %1073 = vmatpush2.msra.mxu0 0.0
      %1074 = vmatprep.subr.mxu0 0.0
      %1075 = vmatpush2.msra.mxu0 0.0
      %1076 = vmatprep.subr.mxu0 0.0
      %1077 = vmatpush2.msra.mxu0 0.0
      %1078 = vmatprep.subr.mxu0 0.0
      %1079 = vmatpush2.msra.mxu0 0.0
      %1080 = vmatprep.subr.mxu0 0.0
      %1081 = vmatpush2.msra.mxu0 0.0
      %1082 = vmatprep.subr.mxu0 0.0
      %1083 = vmatpush2.msra.mxu0 0.0
      %1084 = vmatprep.subr.mxu0 0.0
      %1085 = vmatpush2.msra.mxu0 0.0
      %1086 = vmatprep.subr.mxu0 0.0
      %1087 = vmatpush2.msra.mxu0 0.0
      %1088 = vmatprep.subr.mxu0 0.0
      %1089 = vmatpush2.msra.mxu0 0.0
      %1090 = vmatprep.subr.mxu0 0.0
      %1091 = vmatpush2.msra.mxu0 0.0
      %1092 = vmatprep.subr.mxu0 0.0
      %1093 = vmatpush2.msra.mxu0 0.0
      %1094 = vmatprep.subr.mxu0 0.0
      %1095 = vmatpush2.msra.mxu0 0.0
      %1096 = vmatprep.subr.mxu0 0.0
      %1097 = vmatpush2.msra.mxu0 0.0
      %1098 = vmatprep.subr.mxu0 0.0
      %1099 = vmatpush2.msra.mxu0 0.0
      %1100 = vmatprep.mubr.f32.mxu0 0.0
      %1101 = vmatmul.mubr.f32.gmra.mxu0 %v954
      %v1102 = vpop.f32.mrf.mxu0
      %v1103 = vadd.f32 0.0, %v1102
      %v1104 = vpop.f32.mrf.mxu0
      %1105 = vmatprep.mubr.f32.mxu0 0.0
      %1106 = vmatmul.mubr.f32.gmra.mxu0 %v957
      %v1107 = vpop.f32.mrf.mxu0
      %v1108 = vadd.f32 0.0, %v1107
      %v1109 = vpop.f32.mrf.mxu0
      %1110 = vdwg.mxu0
      %v1111 = vadd.f32 %v932, %v1026
      %v1112 = vadd.f32 %v933, %v1028
      %v1113 = vadd.f32 %v934, %v1103
      %v1114 = vadd.f32 %v935, %v1032
      %v1115 = vadd.f32 %v936, %v1034
      %v1116 = vadd.f32 %v937, %v1108
      %s1117 = scalar_lea.vmem %s216, 80
      %v1118 = vld [vmem:[%s1117] sm:$0xff]
      %v1119 = vld [vmem:[%s1117 + $0x8] sm:$0xff]
      %1120 = vrot.lane.b32.xlu0 %v242, 108
      %v1121 = vpop.permute.xlu0 %1120
      %1122 = vrot.lane.b32.xlu0 %v243, 108
      %v1123 = vpop.permute.xlu0 %1122
      %1124 = vrot.lane.b32.xlu0 %v244, 108
      %v1125 = vpop.permute.xlu0 %1124
      %vm1126 = vcmask 883712
      %v1127 = vsel %vm1126, %v1121, %v1123
      %v1128 = vsel %vm1126, %v1123, %v1125
      %v1133 = vsel %vm263, %v1118, 0
      %v1136 = vsel %vm263, %v1119, 0
      %1138 = vmatprep.subr.mxu0 0.0
      %1139 = vmatpush1.msra.mxu0 0.0
      %1140 = vmatprep.subr.mxu0 0.0
      %1141 = vmatpush1.msra.mxu0 0.0
      %1142 = vmatprep.subr.mxu0 0.0
      %1143 = vmatpush1.msra.mxu0 0.0
      %1144 = vmatprep.subr.mxu0 0.0
      %1145 = vmatpush1.msra.mxu0 0.0
      %1146 = vmatprep.subr.mxu0 0.0
      %1147 = vmatpush1.msra.mxu0 0.0
      %1148 = vmatprep.subr.mxu0 0.0
      %1149 = vmatpush1.msra.mxu0 0.0
      %1150 = vmatprep.subr.mxu0 0.0
      %1151 = vmatpush1.msra.mxu0 0.0
      %1152 = vmatprep.subr.mxu0 0.0
      %1153 = vmatpush1.msra.mxu0 0.0
      %1154 = vmatprep.subr.mxu0 0.0
      %1155 = vmatpush1.msra.mxu0 0.0
      %1156 = vmatprep.subr.mxu0 0.0
      %1157 = vmatpush1.msra.mxu0 0.0
      %1158 = vmatprep.subr.mxu0 0.0
      %1159 = vmatpush1.msra.mxu0 0.0
      %1160 = vmatprep.subr.mxu0 0.0
      %1161 = vmatpush1.msra.mxu0 0.0
      %1162 = vmatprep.subr.mxu0 0.0
      %1163 = vmatpush1.msra.mxu0 0.0
      %1164 = vmatprep.subr.mxu0 0.0
      %1165 = vmatpush1.msra.mxu0 0.0
      %1166 = vmatprep.subr.mxu0 0.0
      %1167 = vmatpush1.msra.mxu0 0.0
      %1168 = vmatprep.subr.mxu0 %v1128
      %1169 = vmatpush1.msra.mxu0 %v1127
      %1170 = vmatprep.subr.mxu0 0.0
      %1171 = vmatpush2.msra.mxu0 0.0
      %1172 = vmatprep.subr.mxu0 0.0
      %1173 = vmatpush2.msra.mxu0 0.0
      %1174 = vmatprep.subr.mxu0 0.0
      %1175 = vmatpush2.msra.mxu0 0.0
      %1176 = vmatprep.subr.mxu0 0.0
      %1177 = vmatpush2.msra.mxu0 0.0
      %1178 = vmatprep.subr.mxu0 0.0
      %1179 = vmatpush2.msra.mxu0 0.0
      %1180 = vmatprep.subr.mxu0 0.0
      %1181 = vmatpush2.msra.mxu0 0.0
      %1182 = vmatprep.subr.mxu0 0.0
      %1183 = vmatpush2.msra.mxu0 0.0
      %1184 = vmatprep.subr.mxu0 0.0
      %1185 = vmatpush2.msra.mxu0 0.0
      %1186 = vmatprep.subr.mxu0 0.0
      %1187 = vmatpush2.msra.mxu0 0.0
      %1188 = vmatprep.subr.mxu0 0.0
      %1189 = vmatpush2.msra.mxu0 0.0
      %1190 = vmatprep.subr.mxu0 0.0
      %1191 = vmatpush2.msra.mxu0 0.0
      %1192 = vmatprep.subr.mxu0 0.0
      %1193 = vmatpush2.msra.mxu0 0.0
      %1194 = vmatprep.subr.mxu0 0.0
      %1195 = vmatpush2.msra.mxu0 0.0
      %1196 = vmatprep.subr.mxu0 0.0
      %1197 = vmatpush2.msra.mxu0 0.0
      %1198 = vmatprep.subr.mxu0 0.0
      %1199 = vmatpush2.msra.mxu0 0.0
      %1200 = vmatprep.subr.mxu0 0.0
      %1201 = vmatpush2.msra.mxu0 0.0
      %1202 = vmatprep.mubr.f32.mxu0 0.0
      %1203 = vmatmul.mubr.f32.gmra.mxu0 %v1133
      %v1204 = vpop.f32.mrf.mxu0
      %v1205 = vadd.f32 0.0, %v1204
      %v1206 = vpop.f32.mrf.mxu0
      %v1207 = vadd.f32 0.0, %v1206
      %1208 = vmatprep.mubr.f32.mxu0 0.0
      %1209 = vmatmul.mubr.f32.gmra.mxu0 %v1136
      %v1210 = vpop.f32.mrf.mxu0
      %v1211 = vadd.f32 0.0, %v1210
      %v1212 = vpop.f32.mrf.mxu0
      %v1213 = vadd.f32 0.0, %v1212
      %1214 = vdwg.mxu0
      %1215 = vmatprep.subr.mxu0 0.0
      %1216 = vmatpush1.msra.mxu0 0.0
      %1217 = vmatprep.subr.mxu0 0.0
      %1218 = vmatpush1.msra.mxu0 0.0
      %1219 = vmatprep.subr.mxu0 0.0
      %1220 = vmatpush1.msra.mxu0 0.0
      %1221 = vmatprep.subr.mxu0 0.0
      %1222 = vmatpush1.msra.mxu0 0.0
      %1223 = vmatprep.subr.mxu0 0.0
      %1224 = vmatpush1.msra.mxu0 0.0
      %1225 = vmatprep.subr.mxu0 0.0
      %1226 = vmatpush1.msra.mxu0 0.0
      %1227 = vmatprep.subr.mxu0 0.0
      %1228 = vmatpush1.msra.mxu0 0.0
      %1229 = vmatprep.subr.mxu0 0.0
      %1230 = vmatpush1.msra.mxu0 0.0
      %1231 = vmatprep.subr.mxu0 0.0
      %1232 = vmatpush1.msra.mxu0 0.0
      %1233 = vmatprep.subr.mxu0 0.0
      %1234 = vmatpush1.msra.mxu0 0.0
      %1235 = vmatprep.subr.mxu0 0.0
      %1236 = vmatpush1.msra.mxu0 0.0
      %1237 = vmatprep.subr.mxu0 0.0
      %1238 = vmatpush1.msra.mxu0 0.0
      %1239 = vmatprep.subr.mxu0 0.0
      %1240 = vmatpush1.msra.mxu0 0.0
      %1241 = vmatprep.subr.mxu0 0.0
      %1242 = vmatpush1.msra.mxu0 0.0
      %1243 = vmatprep.subr.mxu0 0.0
      %1244 = vmatpush1.msra.mxu0 0.0
      %1245 = vmatprep.subr.mxu0 0.0
      %1246 = vmatpush1.msra.mxu0 %v1125
      %1247 = vmatprep.subr.mxu0 0.0
      %1248 = vmatpush2.msra.mxu0 0.0
      %1249 = vmatprep.subr.mxu0 0.0
      %1250 = vmatpush2.msra.mxu0 0.0
      %1251 = vmatprep.subr.mxu0 0.0
      %1252 = vmatpush2.msra.mxu0 0.0
      %1253 = vmatprep.subr.mxu0 0.0
      %1254 = vmatpush2.msra.mxu0 0.0
      %1255 = vmatprep.subr.mxu0 0.0
      %1256 = vmatpush2.msra.mxu0 0.0
      %1257 = vmatprep.subr.mxu0 0.0
      %1258 = vmatpush2.msra.mxu0 0.0
      %1259 = vmatprep.subr.mxu0 0.0
      %1260 = vmatpush2.msra.mxu0 0.0
      %1261 = vmatprep.subr.mxu0 0.0
      %1262 = vmatpush2.msra.mxu0 0.0
      %1263 = vmatprep.subr.mxu0 0.0
      %1264 = vmatpush2.msra.mxu0 0.0
      %1265 = vmatprep.subr.mxu0 0.0
      %1266 = vmatpush2.msra.mxu0 0.0
      %1267 = vmatprep.subr.mxu0 0.0
      %1268 = vmatpush2.msra.mxu0 0.0
      %1269 = vmatprep.subr.mxu0 0.0
      %1270 = vmatpush2.msra.mxu0 0.0
      %1271 = vmatprep.subr.mxu0 0.0
      %1272 = vmatpush2.msra.mxu0 0.0
      %1273 = vmatprep.subr.mxu0 0.0
      %1274 = vmatpush2.msra.mxu0 0.0
      %1275 = vmatprep.subr.mxu0 0.0
      %1276 = vmatpush2.msra.mxu0 0.0
      %1277 = vmatprep.subr.mxu0 0.0
      %1278 = vmatpush2.msra.mxu0 0.0
      %1279 = vmatprep.mubr.f32.mxu0 0.0
      %1280 = vmatmul.mubr.f32.gmra.mxu0 %v1133
      %v1281 = vpop.f32.mrf.mxu0
      %v1282 = vadd.f32 0.0, %v1281
      %v1283 = vpop.f32.mrf.mxu0
      %1284 = vmatprep.mubr.f32.mxu0 0.0
      %1285 = vmatmul.mubr.f32.gmra.mxu0 %v1136
      %v1286 = vpop.f32.mrf.mxu0
      %v1287 = vadd.f32 0.0, %v1286
      %v1288 = vpop.f32.mrf.mxu0
      %1289 = vdwg.mxu0
      %v1290 = vadd.f32 %v1111, %v1205
      %v1291 = vadd.f32 %v1112, %v1207
      %v1292 = vadd.f32 %v1113, %v1282
      %v1293 = vadd.f32 %v1114, %v1211
      %v1294 = vadd.f32 %v1115, %v1213
      %v1295 = vadd.f32 %v1116, %v1287
      %s1296 = scalar_lea.vmem %s216, 96
      %v1297 = vld [vmem:[%s1296] sm:$0xff]
      %v1298 = vld [vmem:[%s1296 + $0x8] sm:$0xff]
      %1299 = vrot.lane.b32.xlu0 %v242, 92
      %v1300 = vpop.permute.xlu0 %1299
      %1301 = vrot.lane.b32.xlu0 %v243, 92
      %v1302 = vpop.permute.xlu0 %1301
      %1303 = vrot.lane.b32.xlu0 %v244, 92
      %v1304 = vpop.permute.xlu0 %1303
      %vm1305 = vcmask 752640
      %v1306 = vsel %vm1305, %v1300, %v1302
      %v1307 = vsel %vm1305, %v1302, %v1304
      %v1312 = vsel %vm263, %v1297, 0
      %v1315 = vsel %vm263, %v1298, 0
      %1317 = vmatprep.subr.mxu0 0.0
      %1318 = vmatpush1.msra.mxu0 0.0
      %1319 = vmatprep.subr.mxu0 0.0
      %1320 = vmatpush1.msra.mxu0 0.0
      %1321 = vmatprep.subr.mxu0 0.0
      %1322 = vmatpush1.msra.mxu0 0.0
      %1323 = vmatprep.subr.mxu0 0.0
      %1324 = vmatpush1.msra.mxu0 0.0
      %1325 = vmatprep.subr.mxu0 0.0
      %1326 = vmatpush1.msra.mxu0 0.0
      %1327 = vmatprep.subr.mxu0 0.0
      %1328 = vmatpush1.msra.mxu0 0.0
      %1329 = vmatprep.subr.mxu0 0.0
      %1330 = vmatpush1.msra.mxu0 0.0
      %1331 = vmatprep.subr.mxu0 0.0
      %1332 = vmatpush1.msra.mxu0 0.0
      %1333 = vmatprep.subr.mxu0 0.0
      %1334 = vmatpush1.msra.mxu0 0.0
      %1335 = vmatprep.subr.mxu0 0.0
      %1336 = vmatpush1.msra.mxu0 0.0
      %1337 = vmatprep.subr.mxu0 0.0
      %1338 = vmatpush1.msra.mxu0 0.0
      %1339 = vmatprep.subr.mxu0 0.0
      %1340 = vmatpush1.msra.mxu0 0.0
      %1341 = vmatprep.subr.mxu0 0.0
      %1342 = vmatpush1.msra.mxu0 0.0
      %1343 = vmatprep.subr.mxu0 0.0
      %1344 = vmatpush1.msra.mxu0 0.0
      %1345 = vmatprep.subr.mxu0 0.0
      %1346 = vmatpush1.msra.mxu0 0.0
      %1347 = vmatprep.subr.mxu0 %v1307
      %1348 = vmatpush1.msra.mxu0 %v1306
      %1349 = vmatprep.subr.mxu0 0.0
      %1350 = vmatpush2.msra.mxu0 0.0
      %1351 = vmatprep.subr.mxu0 0.0
      %1352 = vmatpush2.msra.mxu0 0.0
      %1353 = vmatprep.subr.mxu0 0.0
      %1354 = vmatpush2.msra.mxu0 0.0
      %1355 = vmatprep.subr.mxu0 0.0
      %1356 = vmatpush2.msra.mxu0 0.0
      %1357 = vmatprep.subr.mxu0 0.0
      %1358 = vmatpush2.msra.mxu0 0.0
      %1359 = vmatprep.subr.mxu0 0.0
      %1360 = vmatpush2.msra.mxu0 0.0
      %1361 = vmatprep.subr.mxu0 0.0
      %1362 = vmatpush2.msra.mxu0 0.0
      %1363 = vmatprep.subr.mxu0 0.0
      %1364 = vmatpush2.msra.mxu0 0.0
      %1365 = vmatprep.subr.mxu0 0.0
      %1366 = vmatpush2.msra.mxu0 0.0
      %1367 = vmatprep.subr.mxu0 0.0
      %1368 = vmatpush2.msra.mxu0 0.0
      %1369 = vmatprep.subr.mxu0 0.0
      %1370 = vmatpush2.msra.mxu0 0.0
      %1371 = vmatprep.subr.mxu0 0.0
      %1372 = vmatpush2.msra.mxu0 0.0
      %1373 = vmatprep.subr.mxu0 0.0
      %1374 = vmatpush2.msra.mxu0 0.0
      %1375 = vmatprep.subr.mxu0 0.0
      %1376 = vmatpush2.msra.mxu0 0.0
      %1377 = vmatprep.subr.mxu0 0.0
      %1378 = vmatpush2.msra.mxu0 0.0
      %1379 = vmatprep.subr.mxu0 0.0
      %1380 = vmatpush2.msra.mxu0 0.0
      %1381 = vmatprep.mubr.f32.mxu0 0.0
      %1382 = vmatmul.mubr.f32.gmra.mxu0 %v1312
      %v1383 = vpop.f32.mrf.mxu0
      %v1384 = vadd.f32 0.0, %v1383
      %v1385 = vpop.f32.mrf.mxu0
      %v1386 = vadd.f32 0.0, %v1385
      %1387 = vmatprep.mubr.f32.mxu0 0.0
      %1388 = vmatmul.mubr.f32.gmra.mxu0 %v1315
      %v1389 = vpop.f32.mrf.mxu0
      %v1390 = vadd.f32 0.0, %v1389
      %v1391 = vpop.f32.mrf.mxu0
      %v1392 = vadd.f32 0.0, %v1391
      %1393 = vdwg.mxu0
      %1394 = vmatprep.subr.mxu0 0.0
      %1395 = vmatpush1.msra.mxu0 0.0
      %1396 = vmatprep.subr.mxu0 0.0
      %1397 = vmatpush1.msra.mxu0 0.0
      %1398 = vmatprep.subr.mxu0 0.0
      %1399 = vmatpush1.msra.mxu0 0.0
      %1400 = vmatprep.subr.mxu0 0.0
      %1401 = vmatpush1.msra.mxu0 0.0
      %1402 = vmatprep.subr.mxu0 0.0
      %1403 = vmatpush1.msra.mxu0 0.0
      %1404 = vmatprep.subr.mxu0 0.0
      %1405 = vmatpush1.msra.mxu0 0.0
      %1406 = vmatprep.subr.mxu0 0.0
      %1407 = vmatpush1.msra.mxu0 0.0
      %1408 = vmatprep.subr.mxu0 0.0
      %1409 = vmatpush1.msra.mxu0 0.0
      %1410 = vmatprep.subr.mxu0 0.0
      %1411 = vmatpush1.msra.mxu0 0.0
      %1412 = vmatprep.subr.mxu0 0.0
      %1413 = vmatpush1.msra.mxu0 0.0
      %1414 = vmatprep.subr.mxu0 0.0
      %1415 = vmatpush1.msra.mxu0 0.0
      %1416 = vmatprep.subr.mxu0 0.0
      %1417 = vmatpush1.msra.mxu0 0.0
      %1418 = vmatprep.subr.mxu0 0.0
      %1419 = vmatpush1.msra.mxu0 0.0
      %1420 = vmatprep.subr.mxu0 0.0
      %1421 = vmatpush1.msra.mxu0 0.0
      %1422 = vmatprep.subr.mxu0 0.0
      %1423 = vmatpush1.msra.mxu0 0.0
      %1424 = vmatprep.subr.mxu0 0.0
      %1425 = vmatpush1.msra.mxu0 %v1304
      %1426 = vmatprep.subr.mxu0 0.0
      %1427 = vmatpush2.msra.mxu0 0.0
      %1428 = vmatprep.subr.mxu0 0.0
      %1429 = vmatpush2.msra.mxu0 0.0
      %1430 = vmatprep.subr.mxu0 0.0
      %1431 = vmatpush2.msra.mxu0 0.0
      %1432 = vmatprep.subr.mxu0 0.0
      %1433 = vmatpush2.msra.mxu0 0.0
      %1434 = vmatprep.subr.mxu0 0.0
      %1435 = vmatpush2.msra.mxu0 0.0
      %1436 = vmatprep.subr.mxu0 0.0
      %1437 = vmatpush2.msra.mxu0 0.0
      %1438 = vmatprep.subr.mxu0 0.0
      %1439 = vmatpush2.msra.mxu0 0.0
      %1440 = vmatprep.subr.mxu0 0.0
      %1441 = vmatpush2.msra.mxu0 0.0
      %1442 = vmatprep.subr.mxu0 0.0
      %1443 = vmatpush2.msra.mxu0 0.0
      %1444 = vmatprep.subr.mxu0 0.0
      %1445 = vmatpush2.msra.mxu0 0.0
      %1446 = vmatprep.subr.mxu0 0.0
      %1447 = vmatpush2.msra.mxu0 0.0
      %1448 = vmatprep.subr.mxu0 0.0
      %1449 = vmatpush2.msra.mxu0 0.0
      %1450 = vmatprep.subr.mxu0 0.0
      %1451 = vmatpush2.msra.mxu0 0.0
      %1452 = vmatprep.subr.mxu0 0.0
      %1453 = vmatpush2.msra.mxu0 0.0
      %1454 = vmatprep.subr.mxu0 0.0
      %1455 = vmatpush2.msra.mxu0 0.0
      %1456 = vmatprep.subr.mxu0 0.0
      %1457 = vmatpush2.msra.mxu0 0.0
      %1458 = vmatprep.mubr.f32.mxu0 0.0
      %1459 = vmatmul.mubr.f32.gmra.mxu0 %v1312
      %v1460 = vpop.f32.mrf.mxu0
      %v1461 = vadd.f32 0.0, %v1460
      %v1462 = vpop.f32.mrf.mxu0
      %1463 = vmatprep.mubr.f32.mxu0 0.0
      %1464 = vmatmul.mubr.f32.gmra.mxu0 %v1315
      %v1465 = vpop.f32.mrf.mxu0
      %v1466 = vadd.f32 0.0, %v1465
      %v1467 = vpop.f32.mrf.mxu0
      %1468 = vdwg.mxu0
      %v1469 = vadd.f32 %v1290, %v1384
      %v1470 = vadd.f32 %v1291, %v1386
      %v1471 = vadd.f32 %v1292, %v1461
      %v1472 = vadd.f32 %v1293, %v1390
      %v1473 = vadd.f32 %v1294, %v1392
      %v1474 = vadd.f32 %v1295, %v1466
      %s1475 = scalar_lea.vmem %s216, 112
      %v1476 = vld [vmem:[%s1475] sm:$0xff]
      %v1477 = vld [vmem:[%s1475 + $0x8] sm:$0xff]
      %1478 = vrot.lane.b32.xlu0 %v242, 91
      %v1479 = vpop.permute.xlu0 %1478
      %1480 = vrot.lane.b32.xlu0 %v243, 91
      %v1481 = vpop.permute.xlu0 %1480
      %1482 = vrot.lane.b32.xlu0 %v244, 91
      %v1483 = vpop.permute.xlu0 %1482
      %vm1484 = vcmask 744448
      %v1485 = vsel %vm1484, %v1479, %v1481
      %v1486 = vsel %vm1484, %v1481, %v1483
      %v1491 = vsel %vm263, %v1476, 0
      %v1494 = vsel %vm263, %v1477, 0
      %1496 = vmatprep.subr.mxu0 0.0
      %1497 = vmatpush1.msra.mxu0 0.0
      %1498 = vmatprep.subr.mxu0 0.0
      %1499 = vmatpush1.msra.mxu0 0.0
      %1500 = vmatprep.subr.mxu0 0.0
      %1501 = vmatpush1.msra.mxu0 0.0
      %1502 = vmatprep.subr.mxu0 0.0
      %1503 = vmatpush1.msra.mxu0 0.0
      %1504 = vmatprep.subr.mxu0 0.0
      %1505 = vmatpush1.msra.mxu0 0.0
      %1506 = vmatprep.subr.mxu0 0.0
      %1507 = vmatpush1.msra.mxu0 0.0
      %1508 = vmatprep.subr.mxu0 0.0
      %1509 = vmatpush1.msra.mxu0 0.0
      %1510 = vmatprep.subr.mxu0 0.0
      %1511 = vmatpush1.msra.mxu0 0.0
      %1512 = vmatprep.subr.mxu0 0.0
      %1513 = vmatpush1.msra.mxu0 0.0
      %1514 = vmatprep.subr.mxu0 0.0
      %1515 = vmatpush1.msra.mxu0 0.0
      %1516 = vmatprep.subr.mxu0 0.0
      %1517 = vmatpush1.msra.mxu0 0.0
      %1518 = vmatprep.subr.mxu0 0.0
      %1519 = vmatpush1.msra.mxu0 0.0
      %1520 = vmatprep.subr.mxu0 0.0
      %1521 = vmatpush1.msra.mxu0 0.0
      %1522 = vmatprep.subr.mxu0 0.0
      %1523 = vmatpush1.msra.mxu0 0.0
      %1524 = vmatprep.subr.mxu0 0.0
      %1525 = vmatpush1.msra.mxu0 0.0
      %1526 = vmatprep.subr.mxu0 %v1486
      %1527 = vmatpush1.msra.mxu0 %v1485
      %1528 = vmatprep.subr.mxu0 0.0
      %1529 = vmatpush2.msra.mxu0 0.0
      %1530 = vmatprep.subr.mxu0 0.0
      %1531 = vmatpush2.msra.mxu0 0.0
      %1532 = vmatprep.subr.mxu0 0.0
      %1533 = vmatpush2.msra.mxu0 0.0
      %1534 = vmatprep.subr.mxu0 0.0
      %1535 = vmatpush2.msra.mxu0 0.0
      %1536 = vmatprep.subr.mxu0 0.0
      %1537 = vmatpush2.msra.mxu0 0.0
      %1538 = vmatprep.subr.mxu0 0.0
      %1539 = vmatpush2.msra.mxu0 0.0
      %1540 = vmatprep.subr.mxu0 0.0
      %1541 = vmatpush2.msra.mxu0 0.0
      %1542 = vmatprep.subr.mxu0 0.0
      %1543 = vmatpush2.msra.mxu0 0.0
      %1544 = vmatprep.subr.mxu0 0.0
      %1545 = vmatpush2.msra.mxu0 0.0
      %1546 = vmatprep.subr.mxu0 0.0
      %1547 = vmatpush2.msra.mxu0 0.0
      %1548 = vmatprep.subr.mxu0 0.0
      %1549 = vmatpush2.msra.mxu0 0.0
      %1550 = vmatprep.subr.mxu0 0.0
      %1551 = vmatpush2.msra.mxu0 0.0
      %1552 = vmatprep.subr.mxu0 0.0
      %1553 = vmatpush2.msra.mxu0 0.0
      %1554 = vmatprep.subr.mxu0 0.0
      %1555 = vmatpush2.msra.mxu0 0.0
      %1556 = vmatprep.subr.mxu0 0.0
      %1557 = vmatpush2.msra.mxu0 0.0
      %1558 = vmatprep.subr.mxu0 0.0
      %1559 = vmatpush2.msra.mxu0 0.0
      %1560 = vmatprep.mubr.f32.mxu0 0.0
      %1561 = vmatmul.mubr.f32.gmra.mxu0 %v1491
      %v1562 = vpop.f32.mrf.mxu0
      %v1563 = vadd.f32 0.0, %v1562
      %v1564 = vpop.f32.mrf.mxu0
      %v1565 = vadd.f32 0.0, %v1564
      %1566 = vmatprep.mubr.f32.mxu0 0.0
      %1567 = vmatmul.mubr.f32.gmra.mxu0 %v1494
      %v1568 = vpop.f32.mrf.mxu0
      %v1569 = vadd.f32 0.0, %v1568
      %v1570 = vpop.f32.mrf.mxu0
      %v1571 = vadd.f32 0.0, %v1570
      %1572 = vdwg.mxu0
      %1573 = vmatprep.subr.mxu0 0.0
      %1574 = vmatpush1.msra.mxu0 0.0
      %1575 = vmatprep.subr.mxu0 0.0
      %1576 = vmatpush1.msra.mxu0 0.0
      %1577 = vmatprep.subr.mxu0 0.0
      %1578 = vmatpush1.msra.mxu0 0.0
      %1579 = vmatprep.subr.mxu0 0.0
      %1580 = vmatpush1.msra.mxu0 0.0
      %1581 = vmatprep.subr.mxu0 0.0
      %1582 = vmatpush1.msra.mxu0 0.0
      %1583 = vmatprep.subr.mxu0 0.0
      %1584 = vmatpush1.msra.mxu0 0.0
      %1585 = vmatprep.subr.mxu0 0.0
      %1586 = vmatpush1.msra.mxu0 0.0
      %1587 = vmatprep.subr.mxu0 0.0
      %1588 = vmatpush1.msra.mxu0 0.0
      %1589 = vmatprep.subr.mxu0 0.0
      %1590 = vmatpush1.msra.mxu0 0.0
      %1591 = vmatprep.subr.mxu0 0.0
      %1592 = vmatpush1.msra.mxu0 0.0
      %1593 = vmatprep.subr.mxu0 0.0
      %1594 = vmatpush1.msra.mxu0 0.0
      %1595 = vmatprep.subr.mxu0 0.0
      %1596 = vmatpush1.msra.mxu0 0.0
      %1597 = vmatprep.subr.mxu0 0.0
      %1598 = vmatpush1.msra.mxu0 0.0
      %1599 = vmatprep.subr.mxu0 0.0
      %1600 = vmatpush1.msra.mxu0 0.0
      %1601 = vmatprep.subr.mxu0 0.0
      %1602 = vmatpush1.msra.mxu0 0.0
      %1603 = vmatprep.subr.mxu0 0.0
      %1604 = vmatpush1.msra.mxu0 %v1483
      %1605 = vmatprep.subr.mxu0 0.0
      %1606 = vmatpush2.msra.mxu0 0.0
      %1607 = vmatprep.subr.mxu0 0.0
      %1608 = vmatpush2.msra.mxu0 0.0
      %1609 = vmatprep.subr.mxu0 0.0
      %1610 = vmatpush2.msra.mxu0 0.0
      %1611 = vmatprep.subr.mxu0 0.0
      %1612 = vmatpush2.msra.mxu0 0.0
      %1613 = vmatprep.subr.mxu0 0.0
      %1614 = vmatpush2.msra.mxu0 0.0
      %1615 = vmatprep.subr.mxu0 0.0
      %1616 = vmatpush2.msra.mxu0 0.0
      %1617 = vmatprep.subr.mxu0 0.0
      %1618 = vmatpush2.msra.mxu0 0.0
      %1619 = vmatprep.subr.mxu0 0.0
      %1620 = vmatpush2.msra.mxu0 0.0
      %1621 = vmatprep.subr.mxu0 0.0
      %1622 = vmatpush2.msra.mxu0 0.0
      %1623 = vmatprep.subr.mxu0 0.0
      %1624 = vmatpush2.msra.mxu0 0.0
      %1625 = vmatprep.subr.mxu0 0.0
      %1626 = vmatpush2.msra.mxu0 0.0
      %1627 = vmatprep.subr.mxu0 0.0
      %1628 = vmatpush2.msra.mxu0 0.0
      %1629 = vmatprep.subr.mxu0 0.0
      %1630 = vmatpush2.msra.mxu0 0.0
      %1631 = vmatprep.subr.mxu0 0.0
      %1632 = vmatpush2.msra.mxu0 0.0
      %1633 = vmatprep.subr.mxu0 0.0
      %1634 = vmatpush2.msra.mxu0 0.0
      %1635 = vmatprep.subr.mxu0 0.0
      %1636 = vmatpush2.msra.mxu0 0.0
      %1637 = vmatprep.mubr.f32.mxu0 0.0
      %1638 = vmatmul.mubr.f32.gmra.mxu0 %v1491
      %v1639 = vpop.f32.mrf.mxu0
      %v1640 = vadd.f32 0.0, %v1639
      %v1641 = vpop.f32.mrf.mxu0
      %1642 = vmatprep.mubr.f32.mxu0 0.0
      %1643 = vmatmul.mubr.f32.gmra.mxu0 %v1494
      %v1644 = vpop.f32.mrf.mxu0
      %v1645 = vadd.f32 0.0, %v1644
      %v1646 = vpop.f32.mrf.mxu0
      %1647 = vdwg.mxu0
      %v1648 = vadd.f32 %v1469, %v1563
      %v1649 = vadd.f32 %v1470, %v1565
      %v1650 = vadd.f32 %v1471, %v1640
      %v1651 = vadd.f32 %v1472, %v1569
      %v1652 = vadd.f32 %v1473, %v1571
      %v1653 = vadd.f32 %v1474, %v1645
      %s1654 = scalar_lea.vmem %s216, 128
      %v1655 = vld [vmem:[%s1654] sm:$0xff]
      %v1656 = vld [vmem:[%s1654 + $0x8] sm:$0xff]
      %1657 = vrot.lane.b32.xlu0 %v242, 90
      %v1658 = vpop.permute.xlu0 %1657
      %1659 = vrot.lane.b32.xlu0 %v243, 90
      %v1660 = vpop.permute.xlu0 %1659
      %1661 = vrot.lane.b32.xlu0 %v244, 90
      %v1662 = vpop.permute.xlu0 %1661
      %vm1663 = vcmask 736256
      %v1664 = vsel %vm1663, %v1658, %v1660
      %v1665 = vsel %vm1663, %v1660, %v1662
      %v1670 = vsel %vm263, %v1655, 0
      %v1673 = vsel %vm263, %v1656, 0
      %1675 = vmatprep.subr.mxu0 0.0
      %1676 = vmatpush1.msra.mxu0 0.0
      %1677 = vmatprep.subr.mxu0 0.0
      %1678 = vmatpush1.msra.mxu0 0.0
      %1679 = vmatprep.subr.mxu0 0.0
      %1680 = vmatpush1.msra.mxu0 0.0
      %1681 = vmatprep.subr.mxu0 0.0
      %1682 = vmatpush1.msra.mxu0 0.0
      %1683 = vmatprep.subr.mxu0 0.0
      %1684 = vmatpush1.msra.mxu0 0.0
      %1685 = vmatprep.subr.mxu0 0.0
      %1686 = vmatpush1.msra.mxu0 0.0
      %1687 = vmatprep.subr.mxu0 0.0
      %1688 = vmatpush1.msra.mxu0 0.0
      %1689 = vmatprep.subr.mxu0 0.0
      %1690 = vmatpush1.msra.mxu0 0.0
      %1691 = vmatprep.subr.mxu0 0.0
      %1692 = vmatpush1.msra.mxu0 0.0
      %1693 = vmatprep.subr.mxu0 0.0
      %1694 = vmatpush1.msra.mxu0 0.0
      %1695 = vmatprep.subr.mxu0 0.0
      %1696 = vmatpush1.msra.mxu0 0.0
      %1697 = vmatprep.subr.mxu0 0.0
      %1698 = vmatpush1.msra.mxu0 0.0
      %1699 = vmatprep.subr.mxu0 0.0
      %1700 = vmatpush1.msra.mxu0 0.0
      %1701 = vmatprep.subr.mxu0 0.0
      %1702 = vmatpush1.msra.mxu0 0.0
      %1703 = vmatprep.subr.mxu0 0.0
      %1704 = vmatpush1.msra.mxu0 0.0
      %1705 = vmatprep.subr.mxu0 %v1665
      %1706 = vmatpush1.msra.mxu0 %v1664
      %1707 = vmatprep.subr.mxu0 0.0
      %1708 = vmatpush2.msra.mxu0 0.0
      %1709 = vmatprep.subr.mxu0 0.0
      %1710 = vmatpush2.msra.mxu0 0.0
      %1711 = vmatprep.subr.mxu0 0.0
      %1712 = vmatpush2.msra.mxu0 0.0
      %1713 = vmatprep.subr.mxu0 0.0
      %1714 = vmatpush2.msra.mxu0 0.0
      %1715 = vmatprep.subr.mxu0 0.0
      %1716 = vmatpush2.msra.mxu0 0.0
      %1717 = vmatprep.subr.mxu0 0.0
      %1718 = vmatpush2.msra.mxu0 0.0
      %1719 = vmatprep.subr.mxu0 0.0
      %1720 = vmatpush2.msra.mxu0 0.0
      %1721 = vmatprep.subr.mxu0 0.0
      %1722 = vmatpush2.msra.mxu0 0.0
      %1723 = vmatprep.subr.mxu0 0.0
      %1724 = vmatpush2.msra.mxu0 0.0
      %1725 = vmatprep.subr.mxu0 0.0
      %1726 = vmatpush2.msra.mxu0 0.0
      %1727 = vmatprep.subr.mxu0 0.0
      %1728 = vmatpush2.msra.mxu0 0.0
      %1729 = vmatprep.subr.mxu0 0.0
      %1730 = vmatpush2.msra.mxu0 0.0
      %1731 = vmatprep.subr.mxu0 0.0
      %1732 = vmatpush2.msra.mxu0 0.0
      %1733 = vmatprep.subr.mxu0 0.0
      %1734 = vmatpush2.msra.mxu0 0.0
      %1735 = vmatprep.subr.mxu0 0.0
      %1736 = vmatpush2.msra.mxu0 0.0
      %1737 = vmatprep.subr.mxu0 0.0
      %1738 = vmatpush2.msra.mxu0 0.0
      %1739 = vmatprep.mubr.f32.mxu0 0.0
      %1740 = vmatmul.mubr.f32.gmra.mxu0 %v1670
      %v1741 = vpop.f32.mrf.mxu0
      %v1742 = vadd.f32 0.0, %v1741
      %v1743 = vpop.f32.mrf.mxu0
      %v1744 = vadd.f32 0.0, %v1743
      %1745 = vmatprep.mubr.f32.mxu0 0.0
      %1746 = vmatmul.mubr.f32.gmra.mxu0 %v1673
      %v1747 = vpop.f32.mrf.mxu0
      %v1748 = vadd.f32 0.0, %v1747
      %v1749 = vpop.f32.mrf.mxu0
      %v1750 = vadd.f32 0.0, %v1749
      %1751 = vdwg.mxu0
      %1752 = vmatprep.subr.mxu0 0.0
      %1753 = vmatpush1.msra.mxu0 0.0
      %1754 = vmatprep.subr.mxu0 0.0
      %1755 = vmatpush1.msra.mxu0 0.0
      %1756 = vmatprep.subr.mxu0 0.0
      %1757 = vmatpush1.msra.mxu0 0.0
      %1758 = vmatprep.subr.mxu0 0.0
      %1759 = vmatpush1.msra.mxu0 0.0
      %1760 = vmatprep.subr.mxu0 0.0
      %1761 = vmatpush1.msra.mxu0 0.0
      %1762 = vmatprep.subr.mxu0 0.0
      %1763 = vmatpush1.msra.mxu0 0.0
      %1764 = vmatprep.subr.mxu0 0.0
      %1765 = vmatpush1.msra.mxu0 0.0
      %1766 = vmatprep.subr.mxu0 0.0
      %1767 = vmatpush1.msra.mxu0 0.0
      %1768 = vmatprep.subr.mxu0 0.0
      %1769 = vmatpush1.msra.mxu0 0.0
      %1770 = vmatprep.subr.mxu0 0.0
      %1771 = vmatpush1.msra.mxu0 0.0
      %1772 = vmatprep.subr.mxu0 0.0
      %1773 = vmatpush1.msra.mxu0 0.0
      %1774 = vmatprep.subr.mxu0 0.0
      %1775 = vmatpush1.msra.mxu0 0.0
      %1776 = vmatprep.subr.mxu0 0.0
      %1777 = vmatpush1.msra.mxu0 0.0
      %1778 = vmatprep.subr.mxu0 0.0
      %1779 = vmatpush1.msra.mxu0 0.0
      %1780 = vmatprep.subr.mxu0 0.0
      %1781 = vmatpush1.msra.mxu0 0.0
      %1782 = vmatprep.subr.mxu0 0.0
      %1783 = vmatpush1.msra.mxu0 %v1662
      %1784 = vmatprep.subr.mxu0 0.0
      %1785 = vmatpush2.msra.mxu0 0.0
      %1786 = vmatprep.subr.mxu0 0.0
      %1787 = vmatpush2.msra.mxu0 0.0
      %1788 = vmatprep.subr.mxu0 0.0
      %1789 = vmatpush2.msra.mxu0 0.0
      %1790 = vmatprep.subr.mxu0 0.0
      %1791 = vmatpush2.msra.mxu0 0.0
      %1792 = vmatprep.subr.mxu0 0.0
      %1793 = vmatpush2.msra.mxu0 0.0
      %1794 = vmatprep.subr.mxu0 0.0
      %1795 = vmatpush2.msra.mxu0 0.0
      %1796 = vmatprep.subr.mxu0 0.0
      %1797 = vmatpush2.msra.mxu0 0.0
      %1798 = vmatprep.subr.mxu0 0.0
      %1799 = vmatpush2.msra.mxu0 0.0
      %1800 = vmatprep.subr.mxu0 0.0
      %1801 = vmatpush2.msra.mxu0 0.0
      %1802 = vmatprep.subr.mxu0 0.0
      %1803 = vmatpush2.msra.mxu0 0.0
      %1804 = vmatprep.subr.mxu0 0.0
      %1805 = vmatpush2.msra.mxu0 0.0
      %1806 = vmatprep.subr.mxu0 0.0
      %1807 = vmatpush2.msra.mxu0 0.0
      %1808 = vmatprep.subr.mxu0 0.0
      %1809 = vmatpush2.msra.mxu0 0.0
      %1810 = vmatprep.subr.mxu0 0.0
      %1811 = vmatpush2.msra.mxu0 0.0
      %1812 = vmatprep.subr.mxu0 0.0
      %1813 = vmatpush2.msra.mxu0 0.0
      %1814 = vmatprep.subr.mxu0 0.0
      %1815 = vmatpush2.msra.mxu0 0.0
      %1816 = vmatprep.mubr.f32.mxu0 0.0
      %1817 = vmatmul.mubr.f32.gmra.mxu0 %v1670
      %v1818 = vpop.f32.mrf.mxu0
      %v1819 = vadd.f32 0.0, %v1818
      %v1820 = vpop.f32.mrf.mxu0
      %1821 = vmatprep.mubr.f32.mxu0 0.0
      %1822 = vmatmul.mubr.f32.gmra.mxu0 %v1673
      %v1823 = vpop.f32.mrf.mxu0
      %v1824 = vadd.f32 0.0, %v1823
      %v1825 = vpop.f32.mrf.mxu0
      %1826 = vdwg.mxu0
      %v1827 = vadd.f32 %v1648, %v1742
      %v1828 = vadd.f32 %v1649, %v1744
      %v1829 = vadd.f32 %v1650, %v1819
      %v1830 = vadd.f32 %v1651, %v1748
      %v1831 = vadd.f32 %v1652, %v1750
      %v1832 = vadd.f32 %v1653, %v1824
      %v1833 = vld [vmem:[%s222] sm:$0xff]
      %v1834 = vld [vmem:[%s222 + $0x8] sm:$0xff]
      %1836 = vset.pattern.permute.xlu0 0
      %1837 = vperm.xlu0 %1836, %v1833
      %v1838 = vpop.permute.xlu0 %1837
      %1841 = vset.pattern.permute.xlu0 0
      %1842 = vperm.xlu0 %1841, %v1834
      %v1843 = vpop.permute.xlu0 %1842
      %v1845 = vadd.f32 %v1827, %v1838
      %v1846 = vadd.f32 %v1828, %v1838
      %v1847 = vadd.f32 %v1829, %v1838
      %v1848 = vadd.f32 %v1830, %v1843
      %v1849 = vadd.f32 %v1831, %v1843
      %v1850 = vadd.f32 %v1832, %v1843
      %1851 = vst [vmem:[%s238] sm:$0xff] %v1845
      %1852 = vst [vmem:[%s238 + $0x8] sm:$0xff] %v1846
      %vm1853 = vcmask 261120
      %1854 = vst.msk [vmem:[%s238 + $0x10] sm:$0xff] %vm1853, %v1847
      %1855 = vst [vmem:[%s238 + $0x18] sm:$0xff] %v1848
      %1856 = vst [vmem:[%s238 + $0x20] sm:$0xff] %v1849
      %1857 = vst.msk [vmem:[%s238 + $0x28] sm:$0xff] %vm1853, %v1850
      %s1858 = smul.u32 2, %s19
      %p1859 = scmp.lt.s32.totalorder %s18, 1
      %s1860 = scalar_select %p1859, %s18, 1
      %p1861 = scmp.lt.s32.totalorder %s1858, 1
      %s1862 = scalar_select %p1861, %s1858, 1
      %s1863 = smul.addr %s1862, 3
      %s1864 = smul.addr %s1860, 6
      %s1865 = sadd.s32 %s1863, %s1864
      %s1866 = smul.addr %s1865, 8
      %s1867 = scalar_lea.vmem %s3, %s1866
      // Predicated region
      $region33: #{complex_conv2d.1} parent=31 // pred_check
        %p1868 = pneg %p124
      $region34: #{complex_conv2d.1} parent=31 // pred_check_branch
        %1870 = sbr.rel (%p1868) target = $region36
      $region35: #{complex_conv2d.1} parent=31 // pred_region
        %s1871 = smul.u32 2, %s19
      $region36: #{complex_conv2d.1} parent=31 // pred_fallthru
        _
    $region32: #{complex_conv2d.1} parent=5 // pred_fallthru
      _
    %p1872 = scmp.le.s32.totalorder 2, %s9
    // Predicated region
    $region37: #{complex_conv2d.1} parent=5 // pred_check
      %p1873 = pneg %p1872
    $region38: #{complex_conv2d.1} parent=5 // pred_check_branch
      %1875 = sbr.rel (%p1873) target = $region40
    $region39: #{complex_conv2d.1} parent=5 // pred_region
      %s1876 = ssub.s32 %s9, 2
      // Predicated region
      $region41: #{complex_conv2d.1} parent=39 // pred_check
        %p1877 = pneg %p130
      $region42: #{complex_conv2d.1} parent=39 // pred_check_branch
        %1879 = sbr.rel (%p1877) target = $region44
      $region43: #{complex_conv2d.1} parent=39 // pred_region
        %s1880 = smul.u32 2, %s21
        %p1881 = scmp.lt.s32.totalorder %s20, 1
        %s1882 = scalar_select %p1881, %s20, 1
        %p1883 = scmp.lt.s32.totalorder %s1880, 1
        %s1884 = scalar_select %p1883, %s1880, 1
        %s1885 = smul.addr %s1884, 3
        %s1886 = smul.addr %s1882, 6
        %s1887 = sadd.s32 %s1885, %s1886
        %s1888 = smul.addr %s1887, 8
        %s1889 = scalar_lea.vmem %s3, %s1888
      $region44: #{complex_conv2d.1} parent=39 // pred_fallthru
        _
    $region40: #{complex_conv2d.1} parent=5 // pred_fallthru
      _
  $region6: #{complex_conv2d.1} parent=0 // loop_footer
    %s13 = sadd.s32 1, %s9
  $region7: #{complex_conv2d.1} parent=0 // loop_footer_branch
    %8 = sbr.rel target = $region3
  $region8: #{complex_conv2d.1} parent=0 // loop_exit
    _

</llo_original>
